<compile_context>
chip_gen: v5e
topology: v5e:2x2
jax: 0.10.0
libtpu: 0.0.40
codegen_flags: <defaults>
</compile_context>

<pallas_src>
import jax
import jax.numpy as jnp
from jax.experimental import pallas as pl
from jax.experimental.pallas import tpu as pltpu


def _rup(x, m):
    return (x + m - 1) // m * m


def _vmem_capacity_bytes():
    """Per-core VMEM capacity; conservative 64 MiB (v7x) fallback if query fails."""
    try:
        cap = int(pltpu.get_tpu_info().vmem_capacity_bytes)
        if cap > 0:
            return cap
    except Exception:
        pass
    return 64 * 1024 * 1024


def _vocab_tiling(V, Hp, weight_bytes):
    """Pick a 128-aligned vocab tile TV sized for this generation's VMEM and a padded vocab
    Vp = nV * TV (so the grid has no ragged tail and tiles stay lane-dense)."""
    Vp128 = _rup(V, 128)
    budget = _vmem_capacity_bytes() // 4          # double-buffered wff tiles + slack
    tv_cap = 256
    while tv_cap < 8192 and 2 * Hp * (tv_cap * 2) * weight_bytes <= budget:
        tv_cap *= 2
    tv_cap = min(tv_cap, Vp128)
    nV = -(-Vp128 // tv_cap)
    TV = _rup(-(-Vp128 // nV), 128)               # balance tiles, keep 128-lane alignment
    Vp = nV * TV
    return TV, nV, Vp


# --------------------------------------------------------------------------------------
# Kernels
# --------------------------------------------------------------------------------------

def _attn_lstm_kernel(emb_ref, h_ref, c_ref, enc_ref, en_ref, wx_ref, b_ref,
                      h_out_ref, c_out_ref):
    """Cosine-similarity attention + fused-gate LSTM cell (runs once per decode step)."""
    h_prev = h_ref[...]                       # (Bp, Hp)
    c_prev = c_ref[...]                       # (Bp, Hp)
    enc = enc_ref[...]                        # (Bp, S, Hp)
    en = en_ref[...]                          # (Bp, 1, S) encoder norms (precomputed)
    emb = emb_ref[...]                        # (Bp, Ep)
    B, Hp = h_prev.shape

    # ---- attention: scores & context on the MXU ----
    hq = h_prev.reshape(B, 1, Hp)
    scores = jnp.einsum('bqh,bsh->bqs', hq, enc,
                        preferred_element_type=jnp.float32)               # (Bp,1,S)
    hn = jnp.sqrt(jnp.sum(h_prev * h_prev, axis=-1, keepdims=True)).reshape(B, 1, 1)
    sim = scores / jnp.maximum(hn * en, 1e-8)
    sim = sim - jnp.max(sim, axis=-1, keepdims=True)
    p = jnp.exp(sim)
    w = p / jnp.sum(p, axis=-1, keepdims=True)                            # (Bp,1,S)
    ctx = jnp.einsum('bqs,bsh->bqh', w, enc,
                     preferred_element_type=jnp.float32).reshape(B, Hp)   # (Bp,Hp)

    # ---- fused LSTMCell: one gate matmul, each gate on its own 128-lane block ----
    x = jnp.concatenate([emb, ctx, h_prev], axis=-1).astype(wx_ref.dtype)  # (Bp, Ep+2Hp)
    gates = jnp.dot(x, wx_ref[...],
                    preferred_element_type=jnp.float32) + b_ref[...]       # (Bp, 4*Hp)
    i_g = jax.nn.sigmoid(gates[:, 0 * Hp:1 * Hp])
    f_g = jax.nn.sigmoid(gates[:, 1 * Hp:2 * Hp])
    g_g = jnp.tanh(gates[:, 2 * Hp:3 * Hp])
    o_g = jax.nn.sigmoid(gates[:, 3 * Hp:4 * Hp])
    c_new = f_g * c_prev + i_g * g_g
    h_new = o_g * jnp.tanh(c_new)

    h_out_ref[...] = h_new
    c_out_ref[...] = c_new


def _proj_kernel(h_ref, wff_ref, bff_ref, logits_ref):
    """Output projection, tiled over the padded vocab; grid axis is parallel-safe."""
    logits_ref[...] = (jnp.dot(h_ref[...].astype(wff_ref.dtype), wff_ref[...],
                               preferred_element_type=jnp.float32) + bff_ref[...])


# --------------------------------------------------------------------------------------
# Params / prep (hoisted out of the decode loop)
# --------------------------------------------------------------------------------------

def init_params(key, target_melody_size, embedding_dim, hidden_size):
    V, E, H = target_melody_size, embedding_dim, hidden_size
    ks = jax.random.split(key, 7)
    scale = 0.1
    return dict(
        embedding=jax.random.normal(ks[0], (V, E), jnp.float32) * scale,
        w_ih=jax.random.normal(ks[1], (4 * H, E + H), jnp.float32) * scale,
        b_ih=jax.random.normal(ks[2], (4 * H,), jnp.float32) * scale,
        w_hh=jax.random.normal(ks[3], (4 * H, H), jnp.float32) * scale,
        b_hh=jax.random.normal(ks[4], (4 * H,), jnp.float32) * scale,
        w_ff=jax.random.normal(ks[5], (V, H), jnp.float32) * scale,
        b_ff=jax.random.normal(ks[6], (V,), jnp.float32) * scale,
    )


def prepare_decoder_params(params, weight_dtype=jnp.bfloat16):
    """One-time weight prep: transpose, fuse i/h gate weights, pad to 128-lane blocks,
    reorder so gate k occupies lanes [k*Hp, k*Hp+H), cast weights to weight_dtype."""
    V, E = params["embedding"].shape
    H = params["w_hh"].shape[1]
    Ep, Hp = _rup(E, 128), _rup(H, 128)
    wbytes = jnp.dtype(weight_dtype).itemsize
    TV, nV, Vp = _vocab_tiling(V, Hp, wbytes)

    w_ih, w_hh = params["w_ih"], params["w_hh"]               # (4H, E+H), (4H, H); [i,f,g,o]
    w_x_g = jnp.transpose(w_ih.reshape(4, H, E + H), (2, 0, 1))   # (E+H, 4, H)
    w_h_g = jnp.transpose(w_hh.reshape(4, H, H), (2, 0, 1))       # (H,   4, H)

    def pad3(a, rows_to):
        return jnp.pad(a, ((0, rows_to - a.shape[0]), (0, 0), (0, Hp - H)))

    wx = jnp.concatenate([pad3(w_x_g[:E], Ep),    # rows for emb
                          pad3(w_x_g[E:], Hp),    # rows for context
                          pad3(w_h_g, Hp)],       # rows for h_prev
                         axis=0).reshape(Ep + 2 * Hp, 4 * Hp).astype(weight_dtype)

    b = jnp.pad((params["b_ih"] + params["b_hh"]).reshape(4, H),
                ((0, 0), (0, Hp - H))).reshape(1, 4 * Hp)                       # f32 bias
    wff = jnp.pad(params["w_ff"].T, ((0, Hp - H), (0, Vp - V))).astype(weight_dtype)
    bff = jnp.pad(params["b_ff"], (0, Vp - V)).reshape(1, Vp)                   # f32 bias
    emb_tab = jnp.pad(params["embedding"], ((0, 0), (0, Ep - E)))               # (V, Ep)

    return dict(emb_tab=emb_tab, wx=wx, b=b, wff=wff, bff=bff,
                dims=(E, H, V, Ep, Hp, Vp, TV, nV))


def prepare_encoder(enc_hidden, prepped):
    """Once per source sequence: (S,B,H) -> lane-dense, batch-sublane-padded (Bp,S,Hp) + norms."""
    E, H, V, Ep, Hp, Vp, TV, nV = prepped["dims"]
    S, B, _ = enc_hidden.shape
    Bp = _rup(B, 8)
    enc_bsh = jnp.transpose(enc_hidden.astype(jnp.float32), (1, 0, 2))       # (B,S,H)
    en = jnp.sqrt(jnp.sum(enc_bsh * enc_bsh, axis=-1))                       # (B,S)
    enc_p = jnp.pad(enc_bsh, ((0, Bp - B), (0, 0), (0, Hp - H)))             # (Bp,S,Hp)
    en_p = jnp.pad(en, ((0, Bp - B), (0, 0))).reshape(Bp, 1, S)              # (Bp,1,S)
    return enc_p, en_p


# --------------------------------------------------------------------------------------
# Forward
# --------------------------------------------------------------------------------------

def decoder_forward(prepped, prev_target, prev_hidden, enc_prep):
    E, H, V, Ep, Hp, Vp, TV, nV = prepped["dims"]
    enc_p, en3 = enc_prep
    B = prev_target.shape[0]
    Bp, S = enc_p.shape[0], enc_p.shape[1]
    Kp = Ep + 2 * Hp
    wbytes = jnp.dtype(prepped["wx"].dtype).itemsize

    tgt_p = jnp.pad(prev_target, (0, Bp - B))
    emb = jnp.take(prepped["emb_tab"], tgt_p, axis=0)                        # (Bp, Ep)
    if prev_hidden is None:
        h_p = jnp.zeros((Bp, Hp), jnp.float32)
        c_p = jnp.zeros((Bp, Hp), jnp.float32)
    else:
        h, c = prev_hidden
        h_p = jnp.pad(h.astype(jnp.float32), ((0, Bp - B), (0, Hp - H)))
        c_p = jnp.pad(c.astype(jnp.float32), ((0, Bp - B), (0, Hp - H)))

    vmem_limit = min(_vmem_capacity_bytes() // 2, 96 * 1024 * 1024)

    # ---- kernel 1: attention + LSTM cell (h/c aliased in-place) ----
    attn_cost = pl.CostEstimate(
        flops=int(4 * Bp * S * Hp + 2 * Bp * Kp * 4 * Hp + 10 * Bp * Hp),
        transcendentals=int(Bp * S + 6 * Bp * Hp),
        bytes_accessed=int(4 * (Bp * Ep + 4 * Bp * Hp + Bp * S * Hp + Bp * S + 4 * Hp)
                           + wbytes * Kp * 4 * Hp),
    )
    h_new, c_new = pl.pallas_call(
        _attn_lstm_kernel,
        out_shape=(jax.ShapeDtypeStruct((Bp, Hp), jnp.float32),
                   jax.ShapeDtypeStruct((Bp, Hp), jnp.float32)),
        input_output_aliases={1: 0, 2: 1},
        compiler_params=pltpu.CompilerParams(vmem_limit_bytes=vmem_limit),
        cost_estimate=attn_cost,
    )(emb, h_p, c_p, enc_p, en3, prepped["wx"], prepped["b"])

    # ---- kernel 2: vocab projection, parallel over vocab tiles ----
    proj_cost = pl.CostEstimate(
        flops=int(2 * Bp * Hp * Vp),
        transcendentals=0,
        bytes_accessed=int(wbytes * Hp * Vp + 4 * (Vp + Bp * Hp + Bp * Vp)),
    )
    logits_p = pl.pallas_call(
        _proj_kernel,
        grid=(nV,),
        in_specs=[
            pl.BlockSpec((Bp, Hp), lambda j: (0, 0)),
            pl.BlockSpec((Hp, TV), lambda j: (0, j)),
            pl.BlockSpec((1, TV), lambda j: (0, j)),
        ],
        out_specs=pl.BlockSpec((Bp, TV), lambda j: (0, j)),
        out_shape=jax.ShapeDtypeStruct((Bp, Vp), jnp.float32),
        compiler_params=pltpu.CompilerParams(
            dimension_semantics=("parallel",),
            vmem_limit_bytes=vmem_limit),
        cost_estimate=proj_cost,
    )(h_new, prepped["wff"], prepped["bff"])

    return logits_p[:B, :V], (h_new[:B, :H], c_new[:B, :H])


def decoder_forward_ref(params, prev_target, prev_hidden, enc_hidden):
    """Pure-JAX reference mirroring the PyTorch module, for a correctness check."""
    V, E = params["embedding"].shape
    H = params["w_hh"].shape[1]
    B = prev_target.shape[0]
    emb = jnp.take(params["embedding"], prev_target, axis=0)
    if prev_hidden is None:
        prev_hidden = (jnp.zeros((B, H)), jnp.zeros((B, H)))
    h_prev, c_prev = prev_hidden

    eps = 1e-8
    dots = jnp.sum(h_prev[None] * enc_hidden, axis=-1)
    denom = jnp.maximum(jnp.linalg.norm(h_prev, axis=-1)[None]
                        * jnp.linalg.norm(enc_hidden, axis=-1), eps)
    weights = jax.nn.softmax(dots / denom, axis=0)                    # (S, B)
    context = jnp.einsum("sb,sbh->bh", weights, enc_hidden)           # (B, H)

    x = jnp.concatenate([emb, context], axis=1)
    gates = x @ params["w_ih"].T + params["b_ih"] + h_prev @ params["w_hh"].T + params["b_hh"]
    i_g, f_g, g_g, o_g = jnp.split(gates, 4, axis=1)
    c_new = jax.nn.sigmoid(f_g) * c_prev + jax.nn.sigmoid(i_g) * jnp.tanh(g_g)
    h_new = jax.nn.sigmoid(o_g) * jnp.tanh(c_new)
    logits = h_new @ params["w_ff"].T + params["b_ff"]
    return logits, (h_new, c_new)


if __name__ == "__main__":
    # small shapes: batch=2, seq=8, hidden=32, embedding=16, vocab=20
    B, S, H, E, V = 2, 8, 32, 16, 20

    key = jax.random.PRNGKey(0)
    k_param, k_tgt, k_enc, k_h, k_c = jax.random.split(key, 5)

    params = init_params(k_param, target_melody_size=V, embedding_dim=E, hidden_size=H)
    prev_target = jax.random.randint(k_tgt, (B,), 0, V, dtype=jnp.int32)
    enc_hidden = jax.random.normal(k_enc, (S, B, H), jnp.float32)
    prev_hidden = (jax.random.normal(k_h, (B, H), jnp.float32),
                   jax.random.normal(k_c, (B, H), jnp.float32))

    logits_r, (h_r, c_r) = decoder_forward_ref(params, prev_target, prev_hidden, enc_hidden)
    logits0_r, (h0_r, c0_r) = decoder_forward_ref(params, prev_target, None, enc_hidden)

    # ---- exact-precision path (f32 weights): must match the reference to 1e-5 ----
    prepped32 = prepare_decoder_params(params, weight_dtype=jnp.float32)
    enc_prep32 = prepare_encoder(enc_hidden, prepped32)

    logits, (h_new, c_new) = decoder_forward(prepped32, prev_target, prev_hidden, enc_prep32)
    jax.block_until_ready((logits, h_new, c_new))
    assert jnp.allclose(logits, logits_r, atol=1e-5), "logits mismatch"
    assert jnp.allclose(h_new, h_r, atol=1e-5), "hidden mismatch"
    assert jnp.allclose(c_new, c_r, atol=1e-5), "cell mismatch"

    logits0, (h0, c0) = decoder_forward(prepped32, prev_target, None, enc_prep32)
    jax.block_until_ready(logits0)
    assert jnp.allclose(logits0, logits0_r, atol=1e-5), "logits mismatch (None hidden)"
    assert jnp.allclose(h0, h0_r, atol=1e-5), "hidden mismatch (None hidden)"
    assert jnp.allclose(c0, c0_r, atol=1e-5), "cell mismatch (None hidden)"

    # ---- production path (bf16 weights, halves the HBM weight stream): loose check ----
    prepped_bf = prepare_decoder_params(params, weight_dtype=jnp.bfloat16)
    enc_prep_bf = prepare_encoder(enc_hidden, prepped_bf)
    logits_b, (h_b, c_b) = decoder_forward(prepped_bf, prev_target, prev_hidden, enc_prep_bf)
    jax.block_until_ready((logits_b, h_b, c_b))
    assert jnp.allclose(logits_b, logits_r, atol=5e-2), "bf16 logits drifted"
    assert jnp.allclose(h_b, h_r, atol=2e-2), "bf16 hidden drifted"
    assert jnp.allclose(c_b, c_r, atol=2e-2), "bf16 cell drifted"

    print("KERNEL_OK")
</pallas_src>

<mosaic_0001>
module attributes {stable_mosaic.version = 11 : i64} {
  func.func @_attn_lstm_kernel(%arg0: memref<8x128xf32, #tpu.memory_space<vmem>>, %arg1: memref<8x128xf32, #tpu.memory_space<vmem>>, %arg2: memref<8x128xf32, #tpu.memory_space<vmem>>, %arg3: memref<8x8x128xf32, #tpu.memory_space<vmem>>, %arg4: memref<8x1x8xf32, #tpu.memory_space<vmem>>, %arg5: memref<384x512xf32, #tpu.memory_space<vmem>>, %arg6: memref<1x512xf32, #tpu.memory_space<vmem>>, %arg7: memref<8x128xf32, #tpu.memory_space<vmem>>, %arg8: memref<8x128xf32, #tpu.memory_space<vmem>>) attributes {dimension_semantics = [], scalar_prefetch = 0 : i64, scratch_operands = 0 : i64, tpu.core_type = #tpu.core_type<tc>} {
    %c0 = arith.constant 0 : index
    %c0_0 = arith.constant 0 : index
    %0 = vector.load %arg1[%c0, %c0_0] : memref<8x128xf32, #tpu.memory_space<vmem>>, vector<8x128xf32>
    %c0_1 = arith.constant 0 : index
    %c0_2 = arith.constant 0 : index
    %1 = vector.load %arg2[%c0_1, %c0_2] : memref<8x128xf32, #tpu.memory_space<vmem>>, vector<8x128xf32>
    %c0_3 = arith.constant 0 : index
    %c0_4 = arith.constant 0 : index
    %c0_5 = arith.constant 0 : index
    %2 = vector.load %arg3[%c0_3, %c0_4, %c0_5] : memref<8x8x128xf32, #tpu.memory_space<vmem>>, vector<8x8x128xf32>
    %c0_6 = arith.constant 0 : index
    %c0_7 = arith.constant 0 : index
    %c0_8 = arith.constant 0 : index
    %3 = vector.load %arg4[%c0_6, %c0_7, %c0_8] : memref<8x1x8xf32, #tpu.memory_space<vmem>>, vector<8x1x8xf32>
    %c0_9 = arith.constant 0 : index
    %c0_10 = arith.constant 0 : index
    %4 = vector.load %arg0[%c0_9, %c0_10] : memref<8x128xf32, #tpu.memory_space<vmem>>, vector<8x128xf32>
    %5 = vector.shape_cast %0 : vector<8x128xf32> to vector<8x1x128xf32>
    "tpu.trace_start"() <{level = 10 : i32, message = "bqh,bsh->bqs"}> : () -> ()
    %cst = arith.constant dense<0.000000e+00> : vector<8x1x8xf32>
    %6 = tpu.matmul %5, %2, %cst {dimension_numbers = #tpu.dot_dimension_numbers<[2], [2], [1], [1], [0, 0, 0, 1, 1, 1], [0], [0]>} : vector<8x1x128xf32>, vector<8x8x128xf32>, vector<8x1x8xf32> -> vector<8x1x8xf32>
    "tpu.trace_stop"() : () -> ()
    %7 = arith.mulf %0, %0 : vector<8x128xf32>
    %cst_11 = arith.constant dense<0.000000e+00> : vector<8xf32>
    %8 = vector.multi_reduction <add>, %7, %cst_11 [1] : vector<8x128xf32> to vector<8xf32>
    %9 = vector.shape_cast %8 : vector<8xf32> to vector<8x1xf32>
    %10 = math.sqrt %9 : vector<8x1xf32>
    %11 = vector.shape_cast %10 : vector<8x1xf32> to vector<8x1x1xf32>
    %12 = vector.broadcast %11 : vector<8x1x1xf32> to vector<8x1x8xf32>
    %13 = arith.mulf %12, %3 : vector<8x1x8xf32>
    %cst_12 = arith.constant 9.99999993E-9 : f32
    %14 = vector.broadcast %cst_12 : f32 to vector<8x1x8xf32>
    %15 = arith.maximumf %13, %14 : vector<8x1x8xf32>
    %16 = arith.divf %6, %15 : vector<8x1x8xf32>
    %cst_13 = arith.constant dense<0xFF800000> : vector<8x1xf32>
    %17 = vector.multi_reduction <maximumf>, %16, %cst_13 [2] : vector<8x1x8xf32> to vector<8x1xf32>
    %18 = vector.shape_cast %17 : vector<8x1xf32> to vector<8x1x1xf32>
    %19 = vector.broadcast %18 : vector<8x1x1xf32> to vector<8x1x8xf32>
    %20 = arith.subf %16, %19 : vector<8x1x8xf32>
    %21 = math.exp %20 : vector<8x1x8xf32>
    %cst_14 = arith.constant dense<0.000000e+00> : vector<8x1xf32>
    %22 = vector.multi_reduction <add>, %21, %cst_14 [2] : vector<8x1x8xf32> to vector<8x1xf32>
    %23 = vector.shape_cast %22 : vector<8x1xf32> to vector<8x1x1xf32>
    %24 = vector.broadcast %23 : vector<8x1x1xf32> to vector<8x1x8xf32>
    %25 = arith.divf %21, %24 : vector<8x1x8xf32>
    "tpu.trace_start"() <{level = 10 : i32, message = "bqs,bsh->bqh"}> : () -> ()
    %cst_15 = arith.constant dense<0.000000e+00> : vector<8x1x128xf32>
    %26 = tpu.matmul %25, %2, %cst_15 {dimension_numbers = #tpu.dot_dimension_numbers<[2], [1], [1], [2], [0, 0, 0, 1, 1, 2], [0], [0]>} : vector<8x1x8xf32>, vector<8x8x128xf32>, vector<8x1x128xf32> -> vector<8x1x128xf32>
    "tpu.trace_stop"() : () -> ()
    %27 = vector.shape_cast %26 : vector<8x1x128xf32> to vector<8x128xf32>
    %28 = tpu.concatenate %4, %27, %0 in 1 : vector<8x128xf32>, vector<8x128xf32>, vector<8x128xf32> -> vector<8x384xf32>
    %c0_16 = arith.constant 0 : index
    %c0_17 = arith.constant 0 : index
    %29 = vector.load %arg5[%c0_16, %c0_17] : memref<384x512xf32, #tpu.memory_space<vmem>>, vector<384x512xf32>
    %cst_18 = arith.constant dense<0.000000e+00> : vector<8x512xf32>
    %30 = tpu.matmul %28, %29, %cst_18 {dimension_numbers = #tpu.dot_dimension_numbers<[1], [0], [0], [1], [0, 0, 1, 1], [], []>} : vector<8x384xf32>, vector<384x512xf32>, vector<8x512xf32> -> vector<8x512xf32>
    %c0_19 = arith.constant 0 : index
    %c0_20 = arith.constant 0 : index
    %31 = vector.load %arg6[%c0_19, %c0_20] : memref<1x512xf32, #tpu.memory_space<vmem>>, vector<1x512xf32>
    %32 = vector.broadcast %31 : vector<1x512xf32> to vector<8x512xf32>
    %33 = arith.addf %30, %32 : vector<8x512xf32>
    %34 = vector.extract_strided_slice %33 {offsets = [0, 0], sizes = [8, 128], strides = [1, 1]} : vector<8x512xf32> to vector<8x128xf32>
    %35 = arith.negf %34 : vector<8x128xf32>
    %36 = math.exp %35 : vector<8x128xf32>
    %cst_21 = arith.constant 1.000000e+00 : f32
    %37 = vector.broadcast %cst_21 : f32 to vector<8x128xf32>
    %38 = arith.addf %37, %36 : vector<8x128xf32>
    %39 = arith.divf %37, %38 : vector<8x128xf32>
    %40 = vector.extract_strided_slice %33 {offsets = [0, 128], sizes = [8, 128], strides = [1, 1]} : vector<8x512xf32> to vector<8x128xf32>
    %41 = arith.negf %40 : vector<8x128xf32>
    %42 = math.exp %41 : vector<8x128xf32>
    %cst_22 = arith.constant 1.000000e+00 : f32
    %43 = vector.broadcast %cst_22 : f32 to vector<8x128xf32>
    %44 = arith.addf %43, %42 : vector<8x128xf32>
    %45 = arith.divf %43, %44 : vector<8x128xf32>
    %46 = vector.extract_strided_slice %33 {offsets = [0, 256], sizes = [8, 128], strides = [1, 1]} : vector<8x512xf32> to vector<8x128xf32>
    %47 = math.tanh %46 : vector<8x128xf32>
    %48 = vector.extract_strided_slice %33 {offsets = [0, 384], sizes = [8, 128], strides = [1, 1]} : vector<8x512xf32> to vector<8x128xf32>
    %49 = arith.negf %48 : vector<8x128xf32>
    %50 = math.exp %49 : vector<8x128xf32>
    %cst_23 = arith.constant 1.000000e+00 : f32
    %51 = vector.broadcast %cst_23 : f32 to vector<8x128xf32>
    %52 = arith.addf %51, %50 : vector<8x128xf32>
    %53 = arith.divf %51, %52 : vector<8x128xf32>
    %54 = arith.mulf %45, %1 : vector<8x128xf32>
    %55 = arith.mulf %39, %47 : vector<8x128xf32>
    %56 = arith.addf %54, %55 : vector<8x128xf32>
    %57 = math.tanh %56 : vector<8x128xf32>
    %58 = arith.mulf %53, %57 : vector<8x128xf32>
    %c0_24 = arith.constant 0 : index
    %c0_25 = arith.constant 0 : index
    %59 = vector.load %arg7[%c0_24, %c0_25] : memref<8x128xf32, #tpu.memory_space<vmem>>, vector<8x128xf32>
    tpu.vector_store %arg7[%c0_24, %c0_25], %58 {strides = array<i32>} : memref<8x128xf32, #tpu.memory_space<vmem>>, vector<8x128xf32>,
    %c0_26 = arith.constant 0 : index
    %c0_27 = arith.constant 0 : index
    %60 = vector.load %arg8[%c0_26, %c0_27] : memref<8x128xf32, #tpu.memory_space<vmem>>, vector<8x128xf32>
    tpu.vector_store %arg8[%c0_26, %c0_27], %56 {strides = array<i32>} : memref<8x128xf32, #tpu.memory_space<vmem>>, vector<8x128xf32>,
    return
  }
}

</mosaic_0001>

<llo_original>
// kernel: tpu_custom_call.1
$region0: #{tpu_custom_call.1}
  #allocation0 [shape = 'u32[]', space=smem, size = 0x4, offset = 0x4, fixed_abs, tag = 'smem constant byte address 0x4 - core index']
  #allocation1 [shape = 'u32[72,128]{1,0:T(1,128)}', space=vmem, size = 0x9000, scoped, tag = 'internal scratch']
  %s0 = inlined_call_operand.vmem [shape: f32[8,128], index: 0, kind: input, shape index: {}]
  %s1 = inlined_call_operand.hbm [shape: f32[8,128], index: 1, kind: input, shape index: {}, may-alias: {1,7}]
  %s2 = inlined_call_operand.hbm [shape: f32[8,128], index: 2, kind: input, shape index: {}, may-alias: {2,8}]
  %s3 = inlined_call_operand.hbm [shape: f32[8,8,128], index: 3, kind: input, shape index: {}]
  %s4 = inlined_call_operand.vmem [shape: f32[8,1,8], index: 4, kind: input, shape index: {}]
  %s5 = inlined_call_operand.hbm [shape: f32[384,512], index: 5, kind: input, shape index: {}]
  %s6 = inlined_call_operand.vmem [shape: f32[1,512], index: 6, kind: input, shape index: {}]
  %s7 = inlined_call_operand.hbm [shape: f32[8,128], index: 7, kind: output, shape index: {0}, may-alias: {1,7}]
  %s8 = inlined_call_operand.hbm [shape: f32[8,128], index: 8, kind: output, shape index: {1}, may-alias: {2,8}]
  %9 = xla_tuple %s7, %s8
  %s10 = sld [smem:[#allocation0]]
  $region62: #{tpu_custom_call.1} parent=0
    _
  %s12 = ssub.s32 1, %s10
  %s13 = scalar_select 0, %s12, %s10
  $region1: #{tpu_custom_call.1} parent=0
    #allocation2 [shape = 'u8[4096]{0}', space=vmem, size = 0x1000, scoped, tag = 'input window, operand 1, single buffered']
    #allocation3 [shape = 's32[1]{0}', space=sflag, size = 0x4, scoped, tag = 'scoped memory for tpu_custom_call.1']
    #allocation4 [shape = 's32[1]{0}', space=sflag, size = 0x4, scoped, tag = 'scoped memory for tpu_custom_call.1']
    #allocation5 [shape = 'u8[4096]{0}', space=vmem, size = 0x1000, scoped, tag = 'input window, operand 2, single buffered']
    #allocation6 [shape = 's32[1]{0}', space=sflag, size = 0x4, scoped, tag = 'scoped memory for tpu_custom_call.1']
    #allocation7 [shape = 'u8[32768]{0}', space=vmem, size = 0x8000, scoped, tag = 'input window, operand 3, single buffered']
    #allocation8 [shape = 'u8[786432]{0}', space=vmem, size = 0xc0000, scoped, tag = 'input window, operand 5, single buffered']
    #allocation9 [shape = 's32[1]{0}', space=sflag, size = 0x4, scoped, tag = 'scoped memory for tpu_custom_call.1']
    #allocation10 [shape = 'u8[4096]{0}', space=vmem, size = 0x1000, scoped, tag = 'output window, operand 0, single buffered']
    #allocation11 [shape = 'u8[4096]{0}', space=vmem, size = 0x1000, scoped, tag = 'output window, operand 1, single buffered']
    #allocation12 [shape = 's32[1]{0}', space=sflag, size = 0x4, scoped, tag = 'scoped memory for tpu_custom_call.1']
    %14 = vsyncpa [#allocation3], 0
    %15 = vsyncpa [#allocation6], 0
    %16 = vsyncpa [#allocation9], 0
    %17 = vsyncpa [#allocation4], 0
    %18 = vsyncpa [#allocation12], 0
    // Predicated region
    $region2: #{tpu_custom_call.1} parent=1 // pred_check
      _
    $region3: #{tpu_custom_call.1} parent=1 // pred_check_branch
      %20 = sbr.rel (0) target = $region5
    $region4: #{tpu_custom_call.1} parent=1 // pred_region
      _
    $region5: #{tpu_custom_call.1} parent=1 // pred_fallthru
      _
    // Predicated region
    $region6: #{tpu_custom_call.1} parent=1 // pred_check
      _
    $region7: #{tpu_custom_call.1} parent=1 // pred_check_branch
      %22 = sbr.rel (0) target = $region9
    $region8: #{tpu_custom_call.1} parent=1 // pred_region
      %24 = vsyncadd [#allocation3], 0
      %s26 = sshll.u32 %s1, 4
      %s27 = int_to_ptr.hbm [resolvable:$true] %s26
      %s28 = sshll.u32 [#allocation2], 4
      %s29 = int_to_ptr.vmem [resolvable:$true] %s28
      %31 = dma.hbm_to_vmem [thread:$0]  %s27, 128, %s29, [#allocation3]
    $region9: #{tpu_custom_call.1} parent=1 // pred_fallthru
      _
    // Predicated region
    $region10: #{tpu_custom_call.1} parent=1 // pred_check
      _
    $region11: #{tpu_custom_call.1} parent=1 // pred_check_branch
      %33 = sbr.rel (0) target = $region13
    $region12: #{tpu_custom_call.1} parent=1 // pred_region
      %35 = vsyncadd [#allocation6], 0
      %s37 = sshll.u32 %s2, 4
      %s38 = int_to_ptr.hbm [resolvable:$true] %s37
      %s39 = sshll.u32 [#allocation5], 4
      %s40 = int_to_ptr.vmem [resolvable:$true] %s39
      %42 = dma.hbm_to_vmem [thread:$0]  %s38, 128, %s40, [#allocation6]
    $region13: #{tpu_custom_call.1} parent=1 // pred_fallthru
      _
    // Predicated region
    $region14: #{tpu_custom_call.1} parent=1 // pred_check
      _
    $region15: #{tpu_custom_call.1} parent=1 // pred_check_branch
      %44 = sbr.rel (0) target = $region17
    $region16: #{tpu_custom_call.1} parent=1 // pred_region
      %46 = vsyncadd [#allocation6], 0
      %s47 = sshll.u32 %s3, 4
      %s48 = int_to_ptr.hbm [resolvable:$true] %s47
      %s49 = sshll.u32 [#allocation7], 4
      %s50 = int_to_ptr.vmem [resolvable:$true] %s49
      %55 = dma.hbm_to_vmem [thread:$0]  %s48, 1024, %s50, [#allocation6], 128, 128, 8
    $region17: #{tpu_custom_call.1} parent=1 // pred_fallthru
      _
    // Predicated region
    $region18: #{tpu_custom_call.1} parent=1 // pred_check
      _
    $region19: #{tpu_custom_call.1} parent=1 // pred_check_branch
      %57 = sbr.rel (0) target = $region21
    $region20: #{tpu_custom_call.1} parent=1 // pred_region
      _
    $region21: #{tpu_custom_call.1} parent=1 // pred_fallthru
      _
    // Predicated region
    $region22: #{tpu_custom_call.1} parent=1 // pred_check
      _
    $region23: #{tpu_custom_call.1} parent=1 // pred_check_branch
      %59 = sbr.rel (0) target = $region25
    $region24: #{tpu_custom_call.1} parent=1 // pred_region
      %61 = vsyncadd [#allocation9], 0
      %s62 = sshll.u32 %s5, 4
      %s63 = int_to_ptr.hbm [resolvable:$true] %s62
      %s64 = sshll.u32 [#allocation8], 4
      %s65 = int_to_ptr.vmem [resolvable:$true] %s64
      %70 = dma.hbm_to_vmem [thread:$0]  %s63, 24576, %s65, [#allocation9], 512, 512, 32
    $region25: #{tpu_custom_call.1} parent=1 // pred_fallthru
      _
    // Predicated region
    $region26: #{tpu_custom_call.1} parent=1 // pred_check
      _
    $region27: #{tpu_custom_call.1} parent=1 // pred_check_branch
      %72 = sbr.rel (0) target = $region29
    $region28: #{tpu_custom_call.1} parent=1 // pred_region
      _
    $region29: #{tpu_custom_call.1} parent=1 // pred_fallthru
      _
    // Predicated region
    $region30: #{tpu_custom_call.1} parent=1 // pred_check
      _
    $region31: #{tpu_custom_call.1} parent=1 // pred_check_branch
      %74 = sbr.rel (0) target = $region33
    $region32: #{tpu_custom_call.1} parent=1 // pred_region
      %76 = dma.done [#allocation3], 128
    $region33: #{tpu_custom_call.1} parent=1 // pred_fallthru
      _
    // Predicated region
    $region34: #{tpu_custom_call.1} parent=1 // pred_check
      _
    $region35: #{tpu_custom_call.1} parent=1 // pred_check_branch
      %78 = sbr.rel (0) target = $region37
    $region36: #{tpu_custom_call.1} parent=1 // pred_region
      %80 = dma.done [#allocation6], 128
    $region37: #{tpu_custom_call.1} parent=1 // pred_fallthru
      _
    // Predicated region
    $region38: #{tpu_custom_call.1} parent=1 // pred_check
      _
    $region39: #{tpu_custom_call.1} parent=1 // pred_check_branch
      %82 = sbr.rel (0) target = $region41
    $region40: #{tpu_custom_call.1} parent=1 // pred_region
      %84 = dma.done [#allocation6], 1024
    $region41: #{tpu_custom_call.1} parent=1 // pred_fallthru
      _
    // Predicated region
    $region42: #{tpu_custom_call.1} parent=1 // pred_check
      _
    $region43: #{tpu_custom_call.1} parent=1 // pred_check_branch
      %86 = sbr.rel (0) target = $region45
    $region44: #{tpu_custom_call.1} parent=1 // pred_region
      %88 = dma.done [#allocation9], 24576
    $region45: #{tpu_custom_call.1} parent=1 // pred_fallthru
      _
    %v89 = vld [vmem:[#allocation2] sm:$0xff]
    %v90 = vld [vmem:[#allocation5] sm:$0xff]
    %v91 = vld [vmem:[#allocation7] sm:$0xff]
    %v92 = vld [vmem:[#allocation7 + $0x8] sm:$0xff]
    %v93 = vld [vmem:[#allocation7 + $0x10] sm:$0xff]
    %v94 = vld [vmem:[#allocation7 + $0x18] sm:$0xff]
    %v95 = vld [vmem:[#allocation7 + $0x20] sm:$0xff]
    %v96 = vld [vmem:[#allocation7 + $0x28] sm:$0xff]
    %v97 = vld [vmem:[#allocation7 + $0x30] sm:$0xff]
    %v98 = vld [vmem:[#allocation7 + $0x38] sm:$0xff]
    %v99 = vld [vmem:[%s4] sm:$0x1]
    %v100 = vld [vmem:[%s4 + $0x1] sm:$0x1]
    %v101 = vld [vmem:[%s4 + $0x2] sm:$0x1]
    %v102 = vld [vmem:[%s4 + $0x3] sm:$0x1]
    %v103 = vld [vmem:[%s4 + $0x4] sm:$0x1]
    %v104 = vld [vmem:[%s4 + $0x5] sm:$0x1]
    %v105 = vld [vmem:[%s4 + $0x6] sm:$0x1]
    %v106 = vld [vmem:[%s4 + $0x7] sm:$0x1]
    %v107 = vld [vmem:[%s0] sm:$0xff]
    %v109 = vrot.slane %v89, 1
    %v110 = vrot.slane %v89, 2
    %v111 = vrot.slane %v89, 3
    %v112 = vrot.slane %v89, 4
    %v113 = vrot.slane %v89, 5
    %v114 = vrot.slane %v89, 6
    %v115 = vrot.slane %v89, 7
    %123 = vmatpush.xpose.msra.mxu0 0.0
    %124 = vmatpush.xpose.msra.mxu0 0.0
    %125 = vmatpush.xpose.msra.mxu0 0.0
    %126 = vmatpush.xpose.msra.mxu0 0.0
    %127 = vmatpush.xpose.msra.mxu0 0.0
    %128 = vmatpush.xpose.msra.mxu0 0.0
    %129 = vmatpush.xpose.msra.mxu0 0.0
    %130 = vmatpush.xpose.msra.mxu0 0.0
    %131 = vmatpush.xpose.msra.mxu0 0.0
    %132 = vmatpush.xpose.msra.mxu0 0.0
    %133 = vmatpush.xpose.msra.mxu0 0.0
    %134 = vmatpush.xpose.msra.mxu0 0.0
    %135 = vmatpush.xpose.msra.mxu0 0.0
    %136 = vmatpush.xpose.msra.mxu0 0.0
    %137 = vmatpush.xpose.msra.mxu0 0.0
    %138 = vmatpush.xpose.msra.mxu0 %v91
    %139 = vmatmul.f32.gmra.mxu0 %v89
    %v140 = vpop.f32.mrf.mxu0
    %v141 = vadd.f32 0.0, %v140
    %142 = vdwg.mxu0
    %143 = vmatpush.xpose.msra.mxu0 0.0
    %144 = vmatpush.xpose.msra.mxu0 0.0
    %145 = vmatpush.xpose.msra.mxu0 0.0
    %146 = vmatpush.xpose.msra.mxu0 0.0
    %147 = vmatpush.xpose.msra.mxu0 0.0
    %148 = vmatpush.xpose.msra.mxu0 0.0
    %149 = vmatpush.xpose.msra.mxu0 0.0
    %150 = vmatpush.xpose.msra.mxu0 0.0
    %151 = vmatpush.xpose.msra.mxu0 0.0
    %152 = vmatpush.xpose.msra.mxu0 0.0
    %153 = vmatpush.xpose.msra.mxu0 0.0
    %154 = vmatpush.xpose.msra.mxu0 0.0
    %155 = vmatpush.xpose.msra.mxu0 0.0
    %156 = vmatpush.xpose.msra.mxu0 0.0
    %157 = vmatpush.xpose.msra.mxu0 0.0
    %158 = vmatpush.xpose.msra.mxu0 %v92
    %159 = vmatmul.f32.gmra.mxu0 %v109
    %v160 = vpop.f32.mrf.mxu0
    %v161 = vadd.f32 0.0, %v160
    %162 = vdwg.mxu0
    %163 = vmatpush.xpose.msra.mxu0 0.0
    %164 = vmatpush.xpose.msra.mxu0 0.0
    %165 = vmatpush.xpose.msra.mxu0 0.0
    %166 = vmatpush.xpose.msra.mxu0 0.0
    %167 = vmatpush.xpose.msra.mxu0 0.0
    %168 = vmatpush.xpose.msra.mxu0 0.0
    %169 = vmatpush.xpose.msra.mxu0 0.0
    %170 = vmatpush.xpose.msra.mxu0 0.0
    %171 = vmatpush.xpose.msra.mxu0 0.0
    %172 = vmatpush.xpose.msra.mxu0 0.0
    %173 = vmatpush.xpose.msra.mxu0 0.0
    %174 = vmatpush.xpose.msra.mxu0 0.0
    %175 = vmatpush.xpose.msra.mxu0 0.0
    %176 = vmatpush.xpose.msra.mxu0 0.0
    %177 = vmatpush.xpose.msra.mxu0 0.0
    %178 = vmatpush.xpose.msra.mxu0 %v93
    %179 = vmatmul.f32.gmra.mxu0 %v110
    %v180 = vpop.f32.mrf.mxu0
    %v181 = vadd.f32 0.0, %v180
    %182 = vdwg.mxu0
    %183 = vmatpush.xpose.msra.mxu0 0.0
    %184 = vmatpush.xpose.msra.mxu0 0.0
    %185 = vmatpush.xpose.msra.mxu0 0.0
    %186 = vmatpush.xpose.msra.mxu0 0.0
    %187 = vmatpush.xpose.msra.mxu0 0.0
    %188 = vmatpush.xpose.msra.mxu0 0.0
    %189 = vmatpush.xpose.msra.mxu0 0.0
    %190 = vmatpush.xpose.msra.mxu0 0.0
    %191 = vmatpush.xpose.msra.mxu0 0.0
    %192 = vmatpush.xpose.msra.mxu0 0.0
    %193 = vmatpush.xpose.msra.mxu0 0.0
    %194 = vmatpush.xpose.msra.mxu0 0.0
    %195 = vmatpush.xpose.msra.mxu0 0.0
    %196 = vmatpush.xpose.msra.mxu0 0.0
    %197 = vmatpush.xpose.msra.mxu0 0.0
    %198 = vmatpush.xpose.msra.mxu0 %v94
    %199 = vmatmul.f32.gmra.mxu0 %v111
    %v200 = vpop.f32.mrf.mxu0
    %v201 = vadd.f32 0.0, %v200
    %202 = vdwg.mxu0
    %203 = vmatpush.xpose.msra.mxu0 0.0
    %204 = vmatpush.xpose.msra.mxu0 0.0
    %205 = vmatpush.xpose.msra.mxu0 0.0
    %206 = vmatpush.xpose.msra.mxu0 0.0
    %207 = vmatpush.xpose.msra.mxu0 0.0
    %208 = vmatpush.xpose.msra.mxu0 0.0
    %209 = vmatpush.xpose.msra.mxu0 0.0
    %210 = vmatpush.xpose.msra.mxu0 0.0
    %211 = vmatpush.xpose.msra.mxu0 0.0
    %212 = vmatpush.xpose.msra.mxu0 0.0
    %213 = vmatpush.xpose.msra.mxu0 0.0
    %214 = vmatpush.xpose.msra.mxu0 0.0
    %215 = vmatpush.xpose.msra.mxu0 0.0
    %216 = vmatpush.xpose.msra.mxu0 0.0
    %217 = vmatpush.xpose.msra.mxu0 0.0
    %218 = vmatpush.xpose.msra.mxu0 %v95
    %219 = vmatmul.f32.gmra.mxu0 %v112
    %v220 = vpop.f32.mrf.mxu0
    %v221 = vadd.f32 0.0, %v220
    %222 = vdwg.mxu0
    %223 = vmatpush.xpose.msra.mxu0 0.0
    %224 = vmatpush.xpose.msra.mxu0 0.0
    %225 = vmatpush.xpose.msra.mxu0 0.0
    %226 = vmatpush.xpose.msra.mxu0 0.0
    %227 = vmatpush.xpose.msra.mxu0 0.0
    %228 = vmatpush.xpose.msra.mxu0 0.0
    %229 = vmatpush.xpose.msra.mxu0 0.0
    %230 = vmatpush.xpose.msra.mxu0 0.0
    %231 = vmatpush.xpose.msra.mxu0 0.0
    %232 = vmatpush.xpose.msra.mxu0 0.0
    %233 = vmatpush.xpose.msra.mxu0 0.0
    %234 = vmatpush.xpose.msra.mxu0 0.0
    %235 = vmatpush.xpose.msra.mxu0 0.0
    %236 = vmatpush.xpose.msra.mxu0 0.0
    %237 = vmatpush.xpose.msra.mxu0 0.0
    %238 = vmatpush.xpose.msra.mxu0 %v96
    %239 = vmatmul.f32.gmra.mxu0 %v113
    %v240 = vpop.f32.mrf.mxu0
    %v241 = vadd.f32 0.0, %v240
    %242 = vdwg.mxu0
    %243 = vmatpush.xpose.msra.mxu0 0.0
    %244 = vmatpush.xpose.msra.mxu0 0.0
    %245 = vmatpush.xpose.msra.mxu0 0.0
    %246 = vmatpush.xpose.msra.mxu0 0.0
    %247 = vmatpush.xpose.msra.mxu0 0.0
    %248 = vmatpush.xpose.msra.mxu0 0.0
    %249 = vmatpush.xpose.msra.mxu0 0.0
    %250 = vmatpush.xpose.msra.mxu0 0.0
    %251 = vmatpush.xpose.msra.mxu0 0.0
    %252 = vmatpush.xpose.msra.mxu0 0.0
    %253 = vmatpush.xpose.msra.mxu0 0.0
    %254 = vmatpush.xpose.msra.mxu0 0.0
    %255 = vmatpush.xpose.msra.mxu0 0.0
    %256 = vmatpush.xpose.msra.mxu0 0.0
    %257 = vmatpush.xpose.msra.mxu0 0.0
    %258 = vmatpush.xpose.msra.mxu0 %v97
    %259 = vmatmul.f32.gmra.mxu0 %v114
    %v260 = vpop.f32.mrf.mxu0
    %v261 = vadd.f32 0.0, %v260
    %262 = vdwg.mxu0
    %263 = vmatpush.xpose.msra.mxu0 0.0
    %264 = vmatpush.xpose.msra.mxu0 0.0
    %265 = vmatpush.xpose.msra.mxu0 0.0
    %266 = vmatpush.xpose.msra.mxu0 0.0
    %267 = vmatpush.xpose.msra.mxu0 0.0
    %268 = vmatpush.xpose.msra.mxu0 0.0
    %269 = vmatpush.xpose.msra.mxu0 0.0
    %270 = vmatpush.xpose.msra.mxu0 0.0
    %271 = vmatpush.xpose.msra.mxu0 0.0
    %272 = vmatpush.xpose.msra.mxu0 0.0
    %273 = vmatpush.xpose.msra.mxu0 0.0
    %274 = vmatpush.xpose.msra.mxu0 0.0
    %275 = vmatpush.xpose.msra.mxu0 0.0
    %276 = vmatpush.xpose.msra.mxu0 0.0
    %277 = vmatpush.xpose.msra.mxu0 0.0
    %278 = vmatpush.xpose.msra.mxu0 %v98
    %279 = vmatmul.f32.gmra.mxu0 %v115
    %v280 = vpop.f32.mrf.mxu0
    %v281 = vadd.f32 0.0, %v280
    %282 = vdwg.mxu0
    %v283 = vmul.f32 %v89, %v89
    %284 = vadd.xlane.f32.xlu0 %v283
    %v285 = vpop.xlane.xlu0 %284
    %v286 = vrsqrt.pop %v285
    %v287 = vmul.f32 %v286, %v285
    %v288 = vmul.f32 %v287, %v286
    %v289 = vmul.f32 0.5, %v288
    %v290 = vsub.f32 1.5, %v289
    %v291 = vmul.f32 %v286, %v290
    %v292 = vmul.f32 %v285, %v291
    %vm293 = vcmp.eq.f32.partialorder %v285, inf
    %v294 = vsel %vm293, %v285, %v292
    %vm295 = vcmp.eq.f32.partialorder %v285, 0.0
    %v296 = vand.u32 %v285, 2147483648
    %v297 = vsel %vm295, %v296, %v294
    %v299 = vperm.slane %v297, 0
    %v300 = vperm.slane %v297, 1
    %v301 = vperm.slane %v297, 2
    %v302 = vperm.slane %v297, 3
    %v303 = vperm.slane %v297, 4
    %v304 = vperm.slane %v297, 5
    %v305 = vperm.slane %v297, 6
    %v306 = vperm.slane %v297, 7
    %v315 = vmul.f32 %v299, %v99
    %v316 = vmul.f32 %v300, %v100
    %v317 = vmul.f32 %v301, %v101
    %v318 = vmul.f32 %v302, %v102
    %v319 = vmul.f32 %v303, %v103
    %v320 = vmul.f32 %v304, %v104
    %v321 = vmul.f32 %v305, %v105
    %v322 = vmul.f32 %v306, %v106
    %v323 = vmax.f32 %v315, 1e-08
    %v324 = vmax.f32 %v316, 1e-08
    %v325 = vmax.f32 %v317, 1e-08
    %v326 = vmax.f32 %v318, 1e-08
    %v327 = vmax.f32 %v319, 1e-08
    %v328 = vmax.f32 %v320, 1e-08
    %v329 = vmax.f32 %v321, 1e-08
    %v330 = vmax.f32 %v322, 1e-08
    %v331 = vrcp.pop %v323
    %v332 = vmul.f32 %v323, %v331
    %v333 = vsub.f32 1.0, %v332
    %v334 = vmul.f32 %v331, %v333
    %v335 = vadd.f32 %v331, %v334
    %vm336 = vweird.f32 %v323
    %vm337 = vweird.f32 %v331
    %vm338 = vmor %vm336, %vm337
    %v339 = vsel %vm338, %v331, %v335
    %v340 = vand.u32 2147483647, %v323
    %vm341 = vcmp.eq.f32.partialorder %v340, 8.507059e+37
    %v342 = vand.u32 %v323, 2147483648
    %v343 = vor.u32 1.1754944e-38, %v342
    %v344 = vsel %vm341, %v343, %v339
    %v345 = vmul.f32 %v141, %v344
    %v346 = vrcp.pop %v324
    %v347 = vmul.f32 %v324, %v346
    %v348 = vsub.f32 1.0, %v347
    %v349 = vmul.f32 %v346, %v348
    %v350 = vadd.f32 %v346, %v349
    %vm351 = vweird.f32 %v324
    %vm352 = vweird.f32 %v346
    %vm353 = vmor %vm351, %vm352
    %v354 = vsel %vm353, %v346, %v350
    %v355 = vand.u32 2147483647, %v324
    %vm356 = vcmp.eq.f32.partialorder %v355, 8.507059e+37
    %v357 = vand.u32 %v324, 2147483648
    %v358 = vor.u32 1.1754944e-38, %v357
    %v359 = vsel %vm356, %v358, %v354
    %v360 = vmul.f32 %v161, %v359
    %v361 = vrcp.pop %v325
    %v362 = vmul.f32 %v325, %v361
    %v363 = vsub.f32 1.0, %v362
    %v364 = vmul.f32 %v361, %v363
    %v365 = vadd.f32 %v361, %v364
    %vm366 = vweird.f32 %v325
    %vm367 = vweird.f32 %v361
    %vm368 = vmor %vm366, %vm367
    %v369 = vsel %vm368, %v361, %v365
    %v370 = vand.u32 2147483647, %v325
    %vm371 = vcmp.eq.f32.partialorder %v370, 8.507059e+37
    %v372 = vand.u32 %v325, 2147483648
    %v373 = vor.u32 1.1754944e-38, %v372
    %v374 = vsel %vm371, %v373, %v369
    %v375 = vmul.f32 %v181, %v374
    %v376 = vrcp.pop %v326
    %v377 = vmul.f32 %v326, %v376
    %v378 = vsub.f32 1.0, %v377
    %v379 = vmul.f32 %v376, %v378
    %v380 = vadd.f32 %v376, %v379
    %vm381 = vweird.f32 %v326
    %vm382 = vweird.f32 %v376
    %vm383 = vmor %vm381, %vm382
    %v384 = vsel %vm383, %v376, %v380
    %v385 = vand.u32 2147483647, %v326
    %vm386 = vcmp.eq.f32.partialorder %v385, 8.507059e+37
    %v387 = vand.u32 %v326, 2147483648
    %v388 = vor.u32 1.1754944e-38, %v387
    %v389 = vsel %vm386, %v388, %v384
    %v390 = vmul.f32 %v201, %v389
    %v391 = vrcp.pop %v327
    %v392 = vmul.f32 %v327, %v391
    %v393 = vsub.f32 1.0, %v392
    %v394 = vmul.f32 %v391, %v393
    %v395 = vadd.f32 %v391, %v394
    %vm396 = vweird.f32 %v327
    %vm397 = vweird.f32 %v391
    %vm398 = vmor %vm396, %vm397
    %v399 = vsel %vm398, %v391, %v395
    %v400 = vand.u32 2147483647, %v327
    %vm401 = vcmp.eq.f32.partialorder %v400, 8.507059e+37
    %v402 = vand.u32 %v327, 2147483648
    %v403 = vor.u32 1.1754944e-38, %v402
    %v404 = vsel %vm401, %v403, %v399
    %v405 = vmul.f32 %v221, %v404
    %v406 = vrcp.pop %v328
    %v407 = vmul.f32 %v328, %v406
    %v408 = vsub.f32 1.0, %v407
    %v409 = vmul.f32 %v406, %v408
    %v410 = vadd.f32 %v406, %v409
    %vm411 = vweird.f32 %v328
    %vm412 = vweird.f32 %v406
    %vm413 = vmor %vm411, %vm412
    %v414 = vsel %vm413, %v406, %v410
    %v415 = vand.u32 2147483647, %v328
    %vm416 = vcmp.eq.f32.partialorder %v415, 8.507059e+37
    %v417 = vand.u32 %v328, 2147483648
    %v418 = vor.u32 1.1754944e-38, %v417
    %v419 = vsel %vm416, %v418, %v414
    %v420 = vmul.f32 %v241, %v419
    %v421 = vrcp.pop %v329
    %v422 = vmul.f32 %v329, %v421
    %v423 = vsub.f32 1.0, %v422
    %v424 = vmul.f32 %v421, %v423
    %v425 = vadd.f32 %v421, %v424
    %vm426 = vweird.f32 %v329
    %vm427 = vweird.f32 %v421
    %vm428 = vmor %vm426, %vm427
    %v429 = vsel %vm428, %v421, %v425
    %v430 = vand.u32 2147483647, %v329
    %vm431 = vcmp.eq.f32.partialorder %v430, 8.507059e+37
    %v432 = vand.u32 %v329, 2147483648
    %v433 = vor.u32 1.1754944e-38, %v432
    %v434 = vsel %vm431, %v433, %v429
    %v435 = vmul.f32 %v261, %v434
    %v436 = vrcp.pop %v330
    %v437 = vmul.f32 %v330, %v436
    %v438 = vsub.f32 1.0, %v437
    %v439 = vmul.f32 %v436, %v438
    %v440 = vadd.f32 %v436, %v439
    %vm441 = vweird.f32 %v330
    %vm442 = vweird.f32 %v436
    %vm443 = vmor %vm441, %vm442
    %v444 = vsel %vm443, %v436, %v440
    %v445 = vand.u32 2147483647, %v330
    %vm446 = vcmp.eq.f32.partialorder %v445, 8.507059e+37
    %v447 = vand.u32 %v330, 2147483648
    %v448 = vor.u32 1.1754944e-38, %v447
    %v449 = vsel %vm446, %v448, %v444
    %v450 = vmul.f32 %v281, %v449
    %vm451 = vcmask 57344
    %v452 = vsel %vm451, %v345, -inf
    %453 = vmax.xlane.f32.xlu0 %v452
    %v454 = vpop.xlane.xlu0 %453
    %v455 = vsel %vm451, %v360, -inf
    %456 = vmax.xlane.f32.xlu0 %v455
    %v457 = vpop.xlane.xlu0 %456
    %v458 = vsel %vm451, %v375, -inf
    %459 = vmax.xlane.f32.xlu0 %v458
    %v460 = vpop.xlane.xlu0 %459
    %v461 = vsel %vm451, %v390, -inf
    %462 = vmax.xlane.f32.xlu0 %v461
    %v463 = vpop.xlane.xlu0 %462
    %v464 = vsel %vm451, %v405, -inf
    %465 = vmax.xlane.f32.xlu0 %v464
    %v466 = vpop.xlane.xlu0 %465
    %v467 = vsel %vm451, %v420, -inf
    %468 = vmax.xlane.f32.xlu0 %v467
    %v469 = vpop.xlane.xlu0 %468
    %v470 = vsel %vm451, %v435, -inf
    %471 = vmax.xlane.f32.xlu0 %v470
    %v472 = vpop.xlane.xlu0 %471
    %v473 = vsel %vm451, %v450, -inf
    %474 = vmax.xlane.f32.xlu0 %v473
    %v475 = vpop.xlane.xlu0 %474
    %v476 = vsub.f32 %v345, %v454
    %v477 = vsub.f32 %v360, %v457
    %v478 = vsub.f32 %v375, %v460
    %v479 = vsub.f32 %v390, %v463
    %v480 = vsub.f32 %v405, %v466
    %v481 = vsub.f32 %v420, %v469
    %v482 = vsub.f32 %v435, %v472
    %v483 = vsub.f32 %v450, %v475
    %v484 = vmul.f32 %v476, 1.442695
    %v485 = vpow.pop %v484
    %v486 = vmul.f32 %v477, 1.442695
    %v487 = vpow.pop %v486
    %v488 = vmul.f32 %v478, 1.442695
    %v489 = vpow.pop %v488
    %v490 = vmul.f32 %v479, 1.442695
    %v491 = vpow.pop %v490
    %v492 = vmul.f32 %v480, 1.442695
    %v493 = vpow.pop %v492
    %v494 = vmul.f32 %v481, 1.442695
    %v495 = vpow.pop %v494
    %v496 = vmul.f32 %v482, 1.442695
    %v497 = vpow.pop %v496
    %v498 = vmul.f32 %v483, 1.442695
    %v499 = vpow.pop %v498
    %v500 = vsel %vm451, %v485, 0.0
    %501 = vadd.xlane.f32.xlu0 %v500
    %v502 = vpop.xlane.xlu0 %501
    %v503 = vsel %vm451, %v487, 0.0
    %504 = vadd.xlane.f32.xlu0 %v503
    %v505 = vpop.xlane.xlu0 %504
    %v506 = vsel %vm451, %v489, 0.0
    %507 = vadd.xlane.f32.xlu0 %v506
    %v508 = vpop.xlane.xlu0 %507
    %v509 = vsel %vm451, %v491, 0.0
    %510 = vadd.xlane.f32.xlu0 %v509
    %v511 = vpop.xlane.xlu0 %510
    %v512 = vsel %vm451, %v493, 0.0
    %513 = vadd.xlane.f32.xlu0 %v512
    %v514 = vpop.xlane.xlu0 %513
    %v515 = vsel %vm451, %v495, 0.0
    %516 = vadd.xlane.f32.xlu0 %v515
    %v517 = vpop.xlane.xlu0 %516
    %v518 = vsel %vm451, %v497, 0.0
    %519 = vadd.xlane.f32.xlu0 %v518
    %v520 = vpop.xlane.xlu0 %519
    %v521 = vsel %vm451, %v499, 0.0
    %522 = vadd.xlane.f32.xlu0 %v521
    %v523 = vpop.xlane.xlu0 %522
    %v524 = vrcp.pop %v502
    %v525 = vmul.f32 %v502, %v524
    %v526 = vsub.f32 1.0, %v525
    %v527 = vmul.f32 %v524, %v526
    %v528 = vadd.f32 %v524, %v527
    %vm529 = vweird.f32 %v502
    %vm530 = vweird.f32 %v524
    %vm531 = vmor %vm529, %vm530
    %v532 = vsel %vm531, %v524, %v528
    %v533 = vand.u32 2147483647, %v502
    %vm534 = vcmp.eq.f32.partialorder %v533, 8.507059e+37
    %v535 = vand.u32 %v502, 2147483648
    %v536 = vor.u32 1.1754944e-38, %v535
    %v537 = vsel %vm534, %v536, %v532
    %v538 = vmul.f32 %v485, %v537
    %v539 = vrcp.pop %v505
    %v540 = vmul.f32 %v505, %v539
    %v541 = vsub.f32 1.0, %v540
    %v542 = vmul.f32 %v539, %v541
    %v543 = vadd.f32 %v539, %v542
    %vm544 = vweird.f32 %v505
    %vm545 = vweird.f32 %v539
    %vm546 = vmor %vm544, %vm545
    %v547 = vsel %vm546, %v539, %v543
    %v548 = vand.u32 2147483647, %v505
    %vm549 = vcmp.eq.f32.partialorder %v548, 8.507059e+37
    %v550 = vand.u32 %v505, 2147483648
    %v551 = vor.u32 1.1754944e-38, %v550
    %v552 = vsel %vm549, %v551, %v547
    %v553 = vmul.f32 %v487, %v552
    %v554 = vrcp.pop %v508
    %v555 = vmul.f32 %v508, %v554
    %v556 = vsub.f32 1.0, %v555
    %v557 = vmul.f32 %v554, %v556
    %v558 = vadd.f32 %v554, %v557
    %vm559 = vweird.f32 %v508
    %vm560 = vweird.f32 %v554
    %vm561 = vmor %vm559, %vm560
    %v562 = vsel %vm561, %v554, %v558
    %v563 = vand.u32 2147483647, %v508
    %vm564 = vcmp.eq.f32.partialorder %v563, 8.507059e+37
    %v565 = vand.u32 %v508, 2147483648
    %v566 = vor.u32 1.1754944e-38, %v565
    %v567 = vsel %vm564, %v566, %v562
    %v568 = vmul.f32 %v489, %v567
    %v569 = vrcp.pop %v511
    %v570 = vmul.f32 %v511, %v569
    %v571 = vsub.f32 1.0, %v570
    %v572 = vmul.f32 %v569, %v571
    %v573 = vadd.f32 %v569, %v572
    %vm574 = vweird.f32 %v511
    %vm575 = vweird.f32 %v569
    %vm576 = vmor %vm574, %vm575
    %v577 = vsel %vm576, %v569, %v573
    %v578 = vand.u32 2147483647, %v511
    %vm579 = vcmp.eq.f32.partialorder %v578, 8.507059e+37
    %v580 = vand.u32 %v511, 2147483648
    %v581 = vor.u32 1.1754944e-38, %v580
    %v582 = vsel %vm579, %v581, %v577
    %v583 = vmul.f32 %v491, %v582
    %v584 = vrcp.pop %v514
    %v585 = vmul.f32 %v514, %v584
    %v586 = vsub.f32 1.0, %v585
    %v587 = vmul.f32 %v584, %v586
    %v588 = vadd.f32 %v584, %v587
    %vm589 = vweird.f32 %v514
    %vm590 = vweird.f32 %v584
    %vm591 = vmor %vm589, %vm590
    %v592 = vsel %vm591, %v584, %v588
    %v593 = vand.u32 2147483647, %v514
    %vm594 = vcmp.eq.f32.partialorder %v593, 8.507059e+37
    %v595 = vand.u32 %v514, 2147483648
    %v596 = vor.u32 1.1754944e-38, %v595
    %v597 = vsel %vm594, %v596, %v592
    %v598 = vmul.f32 %v493, %v597
    %v599 = vrcp.pop %v517
    %v600 = vmul.f32 %v517, %v599
    %v601 = vsub.f32 1.0, %v600
    %v602 = vmul.f32 %v599, %v601
    %v603 = vadd.f32 %v599, %v602
    %vm604 = vweird.f32 %v517
    %vm605 = vweird.f32 %v599
    %vm606 = vmor %vm604, %vm605
    %v607 = vsel %vm606, %v599, %v603
    %v608 = vand.u32 2147483647, %v517
    %vm609 = vcmp.eq.f32.partialorder %v608, 8.507059e+37
    %v610 = vand.u32 %v517, 2147483648
    %v611 = vor.u32 1.1754944e-38, %v610
    %v612 = vsel %vm609, %v611, %v607
    %v613 = vmul.f32 %v495, %v612
    %v614 = vrcp.pop %v520
    %v615 = vmul.f32 %v520, %v614
    %v616 = vsub.f32 1.0, %v615
    %v617 = vmul.f32 %v614, %v616
    %v618 = vadd.f32 %v614, %v617
    %vm619 = vweird.f32 %v520
    %vm620 = vweird.f32 %v614
    %vm621 = vmor %vm619, %vm620
    %v622 = vsel %vm621, %v614, %v618
    %v623 = vand.u32 2147483647, %v520
    %vm624 = vcmp.eq.f32.partialorder %v623, 8.507059e+37
    %v625 = vand.u32 %v520, 2147483648
    %v626 = vor.u32 1.1754944e-38, %v625
    %v627 = vsel %vm624, %v626, %v622
    %v628 = vmul.f32 %v497, %v627
    %v629 = vrcp.pop %v523
    %v630 = vmul.f32 %v523, %v629
    %v631 = vsub.f32 1.0, %v630
    %v632 = vmul.f32 %v629, %v631
    %v633 = vadd.f32 %v629, %v632
    %vm634 = vweird.f32 %v523
    %vm635 = vweird.f32 %v629
    %vm636 = vmor %vm634, %vm635
    %v637 = vsel %vm636, %v629, %v633
    %v638 = vand.u32 2147483647, %v523
    %vm639 = vcmp.eq.f32.partialorder %v638, 8.507059e+37
    %v640 = vand.u32 %v523, 2147483648
    %v641 = vor.u32 1.1754944e-38, %v640
    %v642 = vsel %vm639, %v641, %v637
    %v643 = vmul.f32 %v499, %v642
    %vm644 = vcmask 64512
    %v646 = vsel %vm644, %v538, 0
    %648 = vmatpush.msra.mxu0 0.0
    %649 = vmatpush.msra.mxu0 0.0
    %650 = vmatpush.msra.mxu0 0.0
    %651 = vmatpush.msra.mxu0 0.0
    %652 = vmatpush.msra.mxu0 0.0
    %653 = vmatpush.msra.mxu0 0.0
    %654 = vmatpush.msra.mxu0 0.0
    %655 = vmatpush.msra.mxu0 0.0
    %656 = vmatpush.msra.mxu0 0.0
    %657 = vmatpush.msra.mxu0 0.0
    %658 = vmatpush.msra.mxu0 0.0
    %659 = vmatpush.msra.mxu0 0.0
    %660 = vmatpush.msra.mxu0 0.0
    %661 = vmatpush.msra.mxu0 0.0
    %662 = vmatpush.msra.mxu0 0.0
    %663 = vmatpush.msra.mxu0 %v91
    %664 = vmatmul.f32.gmra.mxu0 %v646
    %v665 = vpop.f32.mrf.mxu0
    %v666 = vadd.f32 0.0, %v665
    %667 = vdwg.mxu0
    %v669 = vsel %vm644, %v553, 0
    %671 = vmatpush.msra.mxu0 0.0
    %672 = vmatpush.msra.mxu0 0.0
    %673 = vmatpush.msra.mxu0 0.0
    %674 = vmatpush.msra.mxu0 0.0
    %675 = vmatpush.msra.mxu0 0.0
    %676 = vmatpush.msra.mxu0 0.0
    %677 = vmatpush.msra.mxu0 0.0
    %678 = vmatpush.msra.mxu0 0.0
    %679 = vmatpush.msra.mxu0 0.0
    %680 = vmatpush.msra.mxu0 0.0
    %681 = vmatpush.msra.mxu0 0.0
    %682 = vmatpush.msra.mxu0 0.0
    %683 = vmatpush.msra.mxu0 0.0
    %684 = vmatpush.msra.mxu0 0.0
    %685 = vmatpush.msra.mxu0 0.0
    %686 = vmatpush.msra.mxu0 %v92
    %687 = vmatmul.f32.gmra.mxu0 %v669
    %v688 = vpop.f32.mrf.mxu0
    %v689 = vadd.f32 0.0, %v688
    %690 = vdwg.mxu0
    %v692 = vsel %vm644, %v568, 0
    %694 = vmatpush.msra.mxu0 0.0
    %695 = vmatpush.msra.mxu0 0.0
    %696 = vmatpush.msra.mxu0 0.0
    %697 = vmatpush.msra.mxu0 0.0
    %698 = vmatpush.msra.mxu0 0.0
    %699 = vmatpush.msra.mxu0 0.0
    %700 = vmatpush.msra.mxu0 0.0
    %701 = vmatpush.msra.mxu0 0.0
    %702 = vmatpush.msra.mxu0 0.0
    %703 = vmatpush.msra.mxu0 0.0
    %704 = vmatpush.msra.mxu0 0.0
    %705 = vmatpush.msra.mxu0 0.0
    %706 = vmatpush.msra.mxu0 0.0
    %707 = vmatpush.msra.mxu0 0.0
    %708 = vmatpush.msra.mxu0 0.0
    %709 = vmatpush.msra.mxu0 %v93
    %710 = vmatmul.f32.gmra.mxu0 %v692
    %v711 = vpop.f32.mrf.mxu0
    %v712 = vadd.f32 0.0, %v711
    %713 = vdwg.mxu0
    %v715 = vsel %vm644, %v583, 0
    %717 = vmatpush.msra.mxu0 0.0
    %718 = vmatpush.msra.mxu0 0.0
    %719 = vmatpush.msra.mxu0 0.0
    %720 = vmatpush.msra.mxu0 0.0
    %721 = vmatpush.msra.mxu0 0.0
    %722 = vmatpush.msra.mxu0 0.0
    %723 = vmatpush.msra.mxu0 0.0
    %724 = vmatpush.msra.mxu0 0.0
    %725 = vmatpush.msra.mxu0 0.0
    %726 = vmatpush.msra.mxu0 0.0
    %727 = vmatpush.msra.mxu0 0.0
    %728 = vmatpush.msra.mxu0 0.0
    %729 = vmatpush.msra.mxu0 0.0
    %730 = vmatpush.msra.mxu0 0.0
    %731 = vmatpush.msra.mxu0 0.0
    %732 = vmatpush.msra.mxu0 %v94
    %733 = vmatmul.f32.gmra.mxu0 %v715
    %v734 = vpop.f32.mrf.mxu0
    %v735 = vadd.f32 0.0, %v734
    %736 = vdwg.mxu0
    %v738 = vsel %vm644, %v598, 0
    %740 = vmatpush.msra.mxu0 0.0
    %741 = vmatpush.msra.mxu0 0.0
    %742 = vmatpush.msra.mxu0 0.0
    %743 = vmatpush.msra.mxu0 0.0
    %744 = vmatpush.msra.mxu0 0.0
    %745 = vmatpush.msra.mxu0 0.0
    %746 = vmatpush.msra.mxu0 0.0
    %747 = vmatpush.msra.mxu0 0.0
    %748 = vmatpush.msra.mxu0 0.0
    %749 = vmatpush.msra.mxu0 0.0
    %750 = vmatpush.msra.mxu0 0.0
    %751 = vmatpush.msra.mxu0 0.0
    %752 = vmatpush.msra.mxu0 0.0
    %753 = vmatpush.msra.mxu0 0.0
    %754 = vmatpush.msra.mxu0 0.0
    %755 = vmatpush.msra.mxu0 %v95
    %756 = vmatmul.f32.gmra.mxu0 %v738
    %v757 = vpop.f32.mrf.mxu0
    %v758 = vadd.f32 0.0, %v757
    %759 = vdwg.mxu0
    %v761 = vsel %vm644, %v613, 0
    %763 = vmatpush.msra.mxu0 0.0
    %764 = vmatpush.msra.mxu0 0.0
    %765 = vmatpush.msra.mxu0 0.0
    %766 = vmatpush.msra.mxu0 0.0
    %767 = vmatpush.msra.mxu0 0.0
    %768 = vmatpush.msra.mxu0 0.0
    %769 = vmatpush.msra.mxu0 0.0
    %770 = vmatpush.msra.mxu0 0.0
    %771 = vmatpush.msra.mxu0 0.0
    %772 = vmatpush.msra.mxu0 0.0
    %773 = vmatpush.msra.mxu0 0.0
    %774 = vmatpush.msra.mxu0 0.0
    %775 = vmatpush.msra.mxu0 0.0
    %776 = vmatpush.msra.mxu0 0.0
    %777 = vmatpush.msra.mxu0 0.0
    %778 = vmatpush.msra.mxu0 %v96
    %779 = vmatmul.f32.gmra.mxu0 %v761
    %v780 = vpop.f32.mrf.mxu0
    %v781 = vadd.f32 0.0, %v780
    %782 = vdwg.mxu0
    %v784 = vsel %vm644, %v628, 0
    %786 = vmatpush.msra.mxu0 0.0
    %787 = vmatpush.msra.mxu0 0.0
    %788 = vmatpush.msra.mxu0 0.0
    %789 = vmatpush.msra.mxu0 0.0
    %790 = vmatpush.msra.mxu0 0.0
    %791 = vmatpush.msra.mxu0 0.0
    %792 = vmatpush.msra.mxu0 0.0
    %793 = vmatpush.msra.mxu0 0.0
    %794 = vmatpush.msra.mxu0 0.0
    %795 = vmatpush.msra.mxu0 0.0
    %796 = vmatpush.msra.mxu0 0.0
    %797 = vmatpush.msra.mxu0 0.0
    %798 = vmatpush.msra.mxu0 0.0
    %799 = vmatpush.msra.mxu0 0.0
    %800 = vmatpush.msra.mxu0 0.0
    %801 = vmatpush.msra.mxu0 %v97
    %802 = vmatmul.f32.gmra.mxu0 %v784
    %v803 = vpop.f32.mrf.mxu0
    %v804 = vadd.f32 0.0, %v803
    %805 = vdwg.mxu0
    %v807 = vsel %vm644, %v643, 0
    %809 = vmatpush.msra.mxu0 0.0
    %810 = vmatpush.msra.mxu0 0.0
    %811 = vmatpush.msra.mxu0 0.0
    %812 = vmatpush.msra.mxu0 0.0
    %813 = vmatpush.msra.mxu0 0.0
    %814 = vmatpush.msra.mxu0 0.0
    %815 = vmatpush.msra.mxu0 0.0
    %816 = vmatpush.msra.mxu0 0.0
    %817 = vmatpush.msra.mxu0 0.0
    %818 = vmatpush.msra.mxu0 0.0
    %819 = vmatpush.msra.mxu0 0.0
    %820 = vmatpush.msra.mxu0 0.0
    %821 = vmatpush.msra.mxu0 0.0
    %822 = vmatpush.msra.mxu0 0.0
    %823 = vmatpush.msra.mxu0 0.0
    %824 = vmatpush.msra.mxu0 %v98
    %825 = vmatmul.f32.gmra.mxu0 %v807
    %v826 = vpop.f32.mrf.mxu0
    %v827 = vadd.f32 0.0, %v826
    %828 = vdwg.mxu0
    %v837 = vrot.slane %v689, 7
    %vm838 = vcmask 1041409
    %v839 = vsel %vm838, %v837, %v666
    %v840 = vrot.slane %v712, 6
    %vm841 = vcmask 1042434
    %v842 = vsel %vm841, %v840, %v839
    %v843 = vrot.slane %v735, 5
    %vm844 = vcmask 1043459
    %v845 = vsel %vm844, %v843, %v842
    %v846 = vrot.slane %v758, 4
    %vm847 = vcmask 1044484
    %v848 = vsel %vm847, %v846, %v845
    %v849 = vrot.slane %v781, 3
    %vm850 = vcmask 1045509
    %v851 = vsel %vm850, %v849, %v848
    %v852 = vrot.slane %v804, 2
    %vm853 = vcmask 1046534
    %v854 = vsel %vm853, %v852, %v851
    %v855 = vrot.slane %v827, 1
    %vm856 = vcmask 1047559
    %v857 = vsel %vm856, %v855, %v854
    %v859 = vld [vmem:[#allocation8] sm:$0xff]
    %v860 = vld [vmem:[#allocation8 + $0x8] sm:$0xff]
    %v861 = vld [vmem:[#allocation8 + $0x10] sm:$0xff]
    %v862 = vld [vmem:[#allocation8 + $0x18] sm:$0xff]
    %v863 = vld [vmem:[#allocation8 + $0x20] sm:$0xff]
    %v864 = vld [vmem:[#allocation8 + $0x28] sm:$0xff]
    %v865 = vld [vmem:[#allocation8 + $0x30] sm:$0xff]
    %v866 = vld [vmem:[#allocation8 + $0x38] sm:$0xff]
    %v867 = vld [vmem:[#allocation8 + $0x40] sm:$0xff]
    %v868 = vld [vmem:[#allocation8 + $0x48] sm:$0xff]
    %v869 = vld [vmem:[#allocation8 + $0x50] sm:$0xff]
    %v870 = vld [vmem:[#allocation8 + $0x58] sm:$0xff]
    %v871 = vld [vmem:[#allocation8 + $0x60] sm:$0xff]
    %v872 = vld [vmem:[#allocation8 + $0x68] sm:$0xff]
    %v873 = vld [vmem:[#allocation8 + $0x70] sm:$0xff]
    %v874 = vld [vmem:[#allocation8 + $0x78] sm:$0xff]
    %v875 = vld [vmem:[#allocation8 + $0x80] sm:$0xff]
    %v876 = vld [vmem:[#allocation8 + $0x88] sm:$0xff]
    %v877 = vld [vmem:[#allocation8 + $0x90] sm:$0xff]
    %v878 = vld [vmem:[#allocation8 + $0x98] sm:$0xff]
    %v879 = vld [vmem:[#allocation8 + $0xa0] sm:$0xff]
    %v880 = vld [vmem:[#allocation8 + $0xa8] sm:$0xff]
    %v881 = vld [vmem:[#allocation8 + $0xb0] sm:$0xff]
    %v882 = vld [vmem:[#allocation8 + $0xb8] sm:$0xff]
    %v883 = vld [vmem:[#allocation8 + $0xc0] sm:$0xff]
    %v884 = vld [vmem:[#allocation8 + $0xc8] sm:$0xff]
    %v885 = vld [vmem:[#allocation8 + $0xd0] sm:$0xff]
    %v886 = vld [vmem:[#allocation8 + $0xd8] sm:$0xff]
    %v887 = vld [vmem:[#allocation8 + $0xe0] sm:$0xff]
    %v888 = vld [vmem:[#allocation8 + $0xe8] sm:$0xff]
    %v889 = vld [vmem:[#allocation8 + $0xf0] sm:$0xff]
    %v890 = vld [vmem:[#allocation8 + $0xf8] sm:$0xff]
    %v891 = vld [vmem:[#allocation8 + $0x100] sm:$0xff]
    %v892 = vld [vmem:[#allocation8 + $0x108] sm:$0xff]
    %v893 = vld [vmem:[#allocation8 + $0x110] sm:$0xff]
    %v894 = vld [vmem:[#allocation8 + $0x118] sm:$0xff]
    %v895 = vld [vmem:[#allocation8 + $0x120] sm:$0xff]
    %v896 = vld [vmem:[#allocation8 + $0x128] sm:$0xff]
    %v897 = vld [vmem:[#allocation8 + $0x130] sm:$0xff]
    %v898 = vld [vmem:[#allocation8 + $0x138] sm:$0xff]
    %v899 = vld [vmem:[#allocation8 + $0x140] sm:$0xff]
    %v900 = vld [vmem:[#allocation8 + $0x148] sm:$0xff]
    %v901 = vld [vmem:[#allocation8 + $0x150] sm:$0xff]
    %v902 = vld [vmem:[#allocation8 + $0x158] sm:$0xff]
    %v903 = vld [vmem:[#allocation8 + $0x160] sm:$0xff]
    %v904 = vld [vmem:[#allocation8 + $0x168] sm:$0xff]
    %v905 = vld [vmem:[#allocation8 + $0x170] sm:$0xff]
    %v906 = vld [vmem:[#allocation8 + $0x178] sm:$0xff]
    %v907 = vld [vmem:[#allocation8 + $0x180] sm:$0xff]
    %v908 = vld [vmem:[#allocation8 + $0x188] sm:$0xff]
    %v909 = vld [vmem:[#allocation8 + $0x190] sm:$0xff]
    %v910 = vld [vmem:[#allocation8 + $0x198] sm:$0xff]
    %v911 = vld [vmem:[#allocation8 + $0x1a0] sm:$0xff]
    %v912 = vld [vmem:[#allocation8 + $0x1a8] sm:$0xff]
    %v913 = vld [vmem:[#allocation8 + $0x1b0] sm:$0xff]
    %v914 = vld [vmem:[#allocation8 + $0x1b8] sm:$0xff]
    %v915 = vld [vmem:[#allocation8 + $0x1c0] sm:$0xff]
    %v916 = vld [vmem:[#allocation8 + $0x1c8] sm:$0xff]
    %v917 = vld [vmem:[#allocation8 + $0x1d0] sm:$0xff]
    %v918 = vld [vmem:[#allocation8 + $0x1d8] sm:$0xff]
    %v919 = vld [vmem:[#allocation8 + $0x1e0] sm:$0xff]
    %v920 = vld [vmem:[#allocation8 + $0x1e8] sm:$0xff]
    %v921 = vld [vmem:[#allocation8 + $0x1f0] sm:$0xff]
    %v922 = vld [vmem:[#allocation8 + $0x1f8] sm:$0xff]
    %v923 = vld [vmem:[#allocation8 + $0x200] sm:$0xff]
    %v924 = vld [vmem:[#allocation8 + $0x208] sm:$0xff]
    %v925 = vld [vmem:[#allocation8 + $0x210] sm:$0xff]
    %v926 = vld [vmem:[#allocation8 + $0x218] sm:$0xff]
    %v927 = vld [vmem:[#allocation8 + $0x220] sm:$0xff]
    %v928 = vld [vmem:[#allocation8 + $0x228] sm:$0xff]
    %v929 = vld [vmem:[#allocation8 + $0x230] sm:$0xff]
    %v930 = vld [vmem:[#allocation8 + $0x238] sm:$0xff]
    %v931 = vld [vmem:[#allocation8 + $0x240] sm:$0xff]
    %v932 = vld [vmem:[#allocation8 + $0x248] sm:$0xff]
    %v933 = vld [vmem:[#allocation8 + $0x250] sm:$0xff]
    %v934 = vld [vmem:[#allocation8 + $0x258] sm:$0xff]
    %v935 = vld [vmem:[#allocation8 + $0x260] sm:$0xff]
    %v936 = vld [vmem:[#allocation8 + $0x268] sm:$0xff]
    %v937 = vld [vmem:[#allocation8 + $0x270] sm:$0xff]
    %v938 = vld [vmem:[#allocation8 + $0x278] sm:$0xff]
    %v939 = vld [vmem:[#allocation8 + $0x280] sm:$0xff]
    %v940 = vld [vmem:[#allocation8 + $0x288] sm:$0xff]
    %v941 = vld [vmem:[#allocation8 + $0x290] sm:$0xff]
    %v942 = vld [vmem:[#allocation8 + $0x298] sm:$0xff]
    %v943 = vld [vmem:[#allocation8 + $0x2a0] sm:$0xff]
    %v944 = vld [vmem:[#allocation8 + $0x2a8] sm:$0xff]
    %v945 = vld [vmem:[#allocation8 + $0x2b0] sm:$0xff]
    %v946 = vld [vmem:[#allocation8 + $0x2b8] sm:$0xff]
    %v947 = vld [vmem:[#allocation8 + $0x2c0] sm:$0xff]
    %v948 = vld [vmem:[#allocation8 + $0x2c8] sm:$0xff]
    %v949 = vld [vmem:[#allocation8 + $0x2d0] sm:$0xff]
    %v950 = vld [vmem:[#allocation8 + $0x2d8] sm:$0xff]
    %v951 = vld [vmem:[#allocation8 + $0x2e0] sm:$0xff]
    %v952 = vld [vmem:[#allocation8 + $0x2e8] sm:$0xff]
    %v953 = vld [vmem:[#allocation8 + $0x2f0] sm:$0xff]
    %v954 = vld [vmem:[#allocation8 + $0x2f8] sm:$0xff]
    %v955 = vld [vmem:[#allocation8 + $0x300] sm:$0xff]
    %v956 = vld [vmem:[#allocation8 + $0x308] sm:$0xff]
    %v957 = vld [vmem:[#allocation8 + $0x310] sm:$0xff]
    %v958 = vld [vmem:[#allocation8 + $0x318] sm:$0xff]
    %v959 = vld [vmem:[#allocation8 + $0x320] sm:$0xff]
    %v960 = vld [vmem:[#allocation8 + $0x328] sm:$0xff]
    %v961 = vld [vmem:[#allocation8 + $0x330] sm:$0xff]
    %v962 = vld [vmem:[#allocation8 + $0x338] sm:$0xff]
    %v963 = vld [vmem:[#allocation8 + $0x340] sm:$0xff]
    %v964 = vld [vmem:[#allocation8 + $0x348] sm:$0xff]
    %v965 = vld [vmem:[#allocation8 + $0x350] sm:$0xff]
    %v966 = vld [vmem:[#allocation8 + $0x358] sm:$0xff]
    %v967 = vld [vmem:[#allocation8 + $0x360] sm:$0xff]
    %v968 = vld [vmem:[#allocation8 + $0x368] sm:$0xff]
    %v969 = vld [vmem:[#allocation8 + $0x370] sm:$0xff]
    %v970 = vld [vmem:[#allocation8 + $0x378] sm:$0xff]
    %v971 = vld [vmem:[#allocation8 + $0x380] sm:$0xff]
    %v972 = vld [vmem:[#allocation8 + $0x388] sm:$0xff]
    %v973 = vld [vmem:[#allocation8 + $0x390] sm:$0xff]
    %v974 = vld [vmem:[#allocation8 + $0x398] sm:$0xff]
    %v975 = vld [vmem:[#allocation8 + $0x3a0] sm:$0xff]
    %v976 = vld [vmem:[#allocation8 + $0x3a8] sm:$0xff]
    %v977 = vld [vmem:[#allocation8 + $0x3b0] sm:$0xff]
    %v978 = vld [vmem:[#allocation8 + $0x3b8] sm:$0xff]
    %v979 = vld [vmem:[#allocation8 + $0x3c0] sm:$0xff]
    %v980 = vld [vmem:[#allocation8 + $0x3c8] sm:$0xff]
    %v981 = vld [vmem:[#allocation8 + $0x3d0] sm:$0xff]
    %v982 = vld [vmem:[#allocation8 + $0x3d8] sm:$0xff]
    %v983 = vld [vmem:[#allocation8 + $0x3e0] sm:$0xff]
    %v984 = vld [vmem:[#allocation8 + $0x3e8] sm:$0xff]
    %v985 = vld [vmem:[#allocation8 + $0x3f0] sm:$0xff]
    %v986 = vld [vmem:[#allocation8 + $0x3f8] sm:$0xff]
    %v987 = vld [vmem:[#allocation8 + $0x400] sm:$0xff]
    %v988 = vld [vmem:[#allocation8 + $0x408] sm:$0xff]
    %v989 = vld [vmem:[#allocation8 + $0x410] sm:$0xff]
    %v990 = vld [vmem:[#allocation8 + $0x418] sm:$0xff]
    %v991 = vld [vmem:[#allocation8 + $0x420] sm:$0xff]
    %v992 = vld [vmem:[#allocation8 + $0x428] sm:$0xff]
    %v993 = vld [vmem:[#allocation8 + $0x430] sm:$0xff]
    %v994 = vld [vmem:[#allocation8 + $0x438] sm:$0xff]
    %v995 = vld [vmem:[#allocation8 + $0x440] sm:$0xff]
    %v996 = vld [vmem:[#allocation8 + $0x448] sm:$0xff]
    %v997 = vld [vmem:[#allocation8 + $0x450] sm:$0xff]
    %v998 = vld [vmem:[#allocation8 + $0x458] sm:$0xff]
    %v999 = vld [vmem:[#allocation8 + $0x460] sm:$0xff]
    %v1000 = vld [vmem:[#allocation8 + $0x468] sm:$0xff]
    %v1001 = vld [vmem:[#allocation8 + $0x470] sm:$0xff]
    %v1002 = vld [vmem:[#allocation8 + $0x478] sm:$0xff]
    %v1003 = vld [vmem:[#allocation8 + $0x480] sm:$0xff]
    %v1004 = vld [vmem:[#allocation8 + $0x488] sm:$0xff]
    %v1005 = vld [vmem:[#allocation8 + $0x490] sm:$0xff]
    %v1006 = vld [vmem:[#allocation8 + $0x498] sm:$0xff]
    %v1007 = vld [vmem:[#allocation8 + $0x4a0] sm:$0xff]
    %v1008 = vld [vmem:[#allocation8 + $0x4a8] sm:$0xff]
    %v1009 = vld [vmem:[#allocation8 + $0x4b0] sm:$0xff]
    %v1010 = vld [vmem:[#allocation8 + $0x4b8] sm:$0xff]
    %v1011 = vld [vmem:[#allocation8 + $0x4c0] sm:$0xff]
    %v1012 = vld [vmem:[#allocation8 + $0x4c8] sm:$0xff]
    %v1013 = vld [vmem:[#allocation8 + $0x4d0] sm:$0xff]
    %v1014 = vld [vmem:[#allocation8 + $0x4d8] sm:$0xff]
    %v1015 = vld [vmem:[#allocation8 + $0x4e0] sm:$0xff]
    %v1016 = vld [vmem:[#allocation8 + $0x4e8] sm:$0xff]
    %v1017 = vld [vmem:[#allocation8 + $0x4f0] sm:$0xff]
    %v1018 = vld [vmem:[#allocation8 + $0x4f8] sm:$0xff]
    %v1019 = vld [vmem:[#allocation8 + $0x500] sm:$0xff]
    %v1020 = vld [vmem:[#allocation8 + $0x508] sm:$0xff]
    %v1021 = vld [vmem:[#allocation8 + $0x510] sm:$0xff]
    %v1022 = vld [vmem:[#allocation8 + $0x518] sm:$0xff]
    %v1023 = vld [vmem:[#allocation8 + $0x520] sm:$0xff]
    %v1024 = vld [vmem:[#allocation8 + $0x528] sm:$0xff]
    %v1025 = vld [vmem:[#allocation8 + $0x530] sm:$0xff]
    %v1026 = vld [vmem:[#allocation8 + $0x538] sm:$0xff]
    %v1027 = vld [vmem:[#allocation8 + $0x540] sm:$0xff]
    %v1028 = vld [vmem:[#allocation8 + $0x548] sm:$0xff]
    %v1029 = vld [vmem:[#allocation8 + $0x550] sm:$0xff]
    %v1030 = vld [vmem:[#allocation8 + $0x558] sm:$0xff]
    %v1031 = vld [vmem:[#allocation8 + $0x560] sm:$0xff]
    %v1032 = vld [vmem:[#allocation8 + $0x568] sm:$0xff]
    %v1033 = vld [vmem:[#allocation8 + $0x570] sm:$0xff]
    %v1034 = vld [vmem:[#allocation8 + $0x578] sm:$0xff]
    %v1035 = vld [vmem:[#allocation8 + $0x580] sm:$0xff]
    %v1036 = vld [vmem:[#allocation8 + $0x588] sm:$0xff]
    %v1037 = vld [vmem:[#allocation8 + $0x590] sm:$0xff]
    %v1038 = vld [vmem:[#allocation8 + $0x598] sm:$0xff]
    %v1039 = vld [vmem:[#allocation8 + $0x5a0] sm:$0xff]
    %v1040 = vld [vmem:[#allocation8 + $0x5a8] sm:$0xff]
    %v1041 = vld [vmem:[#allocation8 + $0x5b0] sm:$0xff]
    %v1042 = vld [vmem:[#allocation8 + $0x5b8] sm:$0xff]
    %v1043 = vld [vmem:[#allocation8 + $0x5c0] sm:$0xff]
    %v1044 = vld [vmem:[#allocation8 + $0x5c8] sm:$0xff]
    %v1045 = vld [vmem:[#allocation8 + $0x5d0] sm:$0xff]
    %v1046 = vld [vmem:[#allocation8 + $0x5d8] sm:$0xff]
    %v1047 = vld [vmem:[#allocation8 + $0x5e0] sm:$0xff]
    %v1048 = vld [vmem:[#allocation8 + $0x5e8] sm:$0xff]
    %v1049 = vld [vmem:[#allocation8 + $0x5f0] sm:$0xff]
    %v1050 = vld [vmem:[#allocation8 + $0x5f8] sm:$0xff]
    %v1051 = vld [vmem:[%s6] sm:$0xf]
    %v1053 = vperm.slane %v1051, 0
    %v1054 = vperm.slane %v1051, 1
    %v1055 = vperm.slane %v1051, 2
    %v1056 = vperm.slane %v1051, 3
    %1061 = vmatpush.msra.mxu0 %v919
    %1062 = vmatpush.msra.mxu0 %v915
    %1063 = vmatpush.msra.mxu0 %v911
    %1064 = vmatpush.msra.mxu0 %v907
    %1065 = vmatpush.msra.mxu0 %v903
    %1066 = vmatpush.msra.mxu0 %v899
    %1067 = vmatpush.msra.mxu0 %v895
    %1068 = vmatpush.msra.mxu0 %v891
    %1069 = vmatpush.msra.mxu0 %v887
    %1070 = vmatpush.msra.mxu0 %v883
    %1071 = vmatpush.msra.mxu0 %v879
    %1072 = vmatpush.msra.mxu0 %v875
    %1073 = vmatpush.msra.mxu0 %v871
    %1074 = vmatpush.msra.mxu0 %v867
    %1075 = vmatpush.msra.mxu0 %v863
    %1076 = vmatpush.msra.mxu0 %v859
    %1077 = vmatmul.f32.gmra.mxu0 %v107
    %v1078 = vpop.f32.mrf.mxu0
    %v1079 = vadd.f32 %v1053, %v1078
    %1080 = vdwg.mxu0
    %1081 = vmatpush.msra.mxu0 %v983
    %1082 = vmatpush.msra.mxu0 %v979
    %1083 = vmatpush.msra.mxu0 %v975
    %1084 = vmatpush.msra.mxu0 %v971
    %1085 = vmatpush.msra.mxu0 %v967
    %1086 = vmatpush.msra.mxu0 %v963
    %1087 = vmatpush.msra.mxu0 %v959
    %1088 = vmatpush.msra.mxu0 %v955
    %1089 = vmatpush.msra.mxu0 %v951
    %1090 = vmatpush.msra.mxu0 %v947
    %1091 = vmatpush.msra.mxu0 %v943
    %1092 = vmatpush.msra.mxu0 %v939
    %1093 = vmatpush.msra.mxu0 %v935
    %1094 = vmatpush.msra.mxu0 %v931
    %1095 = vmatpush.msra.mxu0 %v927
    %1096 = vmatpush.msra.mxu0 %v923
    %1097 = vmatmul.f32.gmra.mxu0 %v857
    %v1098 = vpop.f32.mrf.mxu0
    %v1099 = vadd.f32 %v1079, %v1098
    %1100 = vdwg.mxu0
    %1101 = vmatpush.msra.mxu0 %v1047
    %1102 = vmatpush.msra.mxu0 %v1043
    %1103 = vmatpush.msra.mxu0 %v1039
    %1104 = vmatpush.msra.mxu0 %v1035
    %1105 = vmatpush.msra.mxu0 %v1031
    %1106 = vmatpush.msra.mxu0 %v1027
    %1107 = vmatpush.msra.mxu0 %v1023
    %1108 = vmatpush.msra.mxu0 %v1019
    %1109 = vmatpush.msra.mxu0 %v1015
    %1110 = vmatpush.msra.mxu0 %v1011
    %1111 = vmatpush.msra.mxu0 %v1007
    %1112 = vmatpush.msra.mxu0 %v1003
    %1113 = vmatpush.msra.mxu0 %v999
    %1114 = vmatpush.msra.mxu0 %v995
    %1115 = vmatpush.msra.mxu0 %v991
    %1116 = vmatpush.msra.mxu0 %v987
    %1117 = vmatmul.f32.gmra.mxu0 %v89
    %v1118 = vpop.f32.mrf.mxu0
    %v1119 = vadd.f32 %v1099, %v1118
    %1120 = vdwg.mxu0
    %1121 = vmatpush.msra.mxu0 %v920
    %1122 = vmatpush.msra.mxu0 %v916
    %1123 = vmatpush.msra.mxu0 %v912
    %1124 = vmatpush.msra.mxu0 %v908
    %1125 = vmatpush.msra.mxu0 %v904
    %1126 = vmatpush.msra.mxu0 %v900
    %1127 = vmatpush.msra.mxu0 %v896
    %1128 = vmatpush.msra.mxu0 %v892
    %1129 = vmatpush.msra.mxu0 %v888
    %1130 = vmatpush.msra.mxu0 %v884
    %1131 = vmatpush.msra.mxu0 %v880
    %1132 = vmatpush.msra.mxu0 %v876
    %1133 = vmatpush.msra.mxu0 %v872
    %1134 = vmatpush.msra.mxu0 %v868
    %1135 = vmatpush.msra.mxu0 %v864
    %1136 = vmatpush.msra.mxu0 %v860
    %1137 = vmatmul.f32.gmra.mxu0 %v107
    %v1138 = vpop.f32.mrf.mxu0
    %v1139 = vadd.f32 %v1054, %v1138
    %1140 = vdwg.mxu0
    %1141 = vmatpush.msra.mxu0 %v984
    %1142 = vmatpush.msra.mxu0 %v980
    %1143 = vmatpush.msra.mxu0 %v976
    %1144 = vmatpush.msra.mxu0 %v972
    %1145 = vmatpush.msra.mxu0 %v968
    %1146 = vmatpush.msra.mxu0 %v964
    %1147 = vmatpush.msra.mxu0 %v960
    %1148 = vmatpush.msra.mxu0 %v956
    %1149 = vmatpush.msra.mxu0 %v952
    %1150 = vmatpush.msra.mxu0 %v948
    %1151 = vmatpush.msra.mxu0 %v944
    %1152 = vmatpush.msra.mxu0 %v940
    %1153 = vmatpush.msra.mxu0 %v936
    %1154 = vmatpush.msra.mxu0 %v932
    %1155 = vmatpush.msra.mxu0 %v928
    %1156 = vmatpush.msra.mxu0 %v924
    %1157 = vmatmul.f32.gmra.mxu0 %v857
    %v1158 = vpop.f32.mrf.mxu0
    %v1159 = vadd.f32 %v1139, %v1158
    %1160 = vdwg.mxu0
    %1161 = vmatpush.msra.mxu0 %v1048
    %1162 = vmatpush.msra.mxu0 %v1044
    %1163 = vmatpush.msra.mxu0 %v1040
    %1164 = vmatpush.msra.mxu0 %v1036
    %1165 = vmatpush.msra.mxu0 %v1032
    %1166 = vmatpush.msra.mxu0 %v1028
    %1167 = vmatpush.msra.mxu0 %v1024
    %1168 = vmatpush.msra.mxu0 %v1020
    %1169 = vmatpush.msra.mxu0 %v1016
    %1170 = vmatpush.msra.mxu0 %v1012
    %1171 = vmatpush.msra.mxu0 %v1008
    %1172 = vmatpush.msra.mxu0 %v1004
    %1173 = vmatpush.msra.mxu0 %v1000
    %1174 = vmatpush.msra.mxu0 %v996
    %1175 = vmatpush.msra.mxu0 %v992
    %1176 = vmatpush.msra.mxu0 %v988
    %1177 = vmatmul.f32.gmra.mxu0 %v89
    %v1178 = vpop.f32.mrf.mxu0
    %v1179 = vadd.f32 %v1159, %v1178
    %1180 = vdwg.mxu0
    %1181 = vmatpush.msra.mxu0 %v921
    %1182 = vmatpush.msra.mxu0 %v917
    %1183 = vmatpush.msra.mxu0 %v913
    %1184 = vmatpush.msra.mxu0 %v909
    %1185 = vmatpush.msra.mxu0 %v905
    %1186 = vmatpush.msra.mxu0 %v901
    %1187 = vmatpush.msra.mxu0 %v897
    %1188 = vmatpush.msra.mxu0 %v893
    %1189 = vmatpush.msra.mxu0 %v889
    %1190 = vmatpush.msra.mxu0 %v885
    %1191 = vmatpush.msra.mxu0 %v881
    %1192 = vmatpush.msra.mxu0 %v877
    %1193 = vmatpush.msra.mxu0 %v873
    %1194 = vmatpush.msra.mxu0 %v869
    %1195 = vmatpush.msra.mxu0 %v865
    %1196 = vmatpush.msra.mxu0 %v861
    %1197 = vmatmul.f32.gmra.mxu0 %v107
    %v1198 = vpop.f32.mrf.mxu0
    %v1199 = vadd.f32 %v1055, %v1198
    %1200 = vdwg.mxu0
    %1201 = vmatpush.msra.mxu0 %v985
    %1202 = vmatpush.msra.mxu0 %v981
    %1203 = vmatpush.msra.mxu0 %v977
    %1204 = vmatpush.msra.mxu0 %v973
    %1205 = vmatpush.msra.mxu0 %v969
    %1206 = vmatpush.msra.mxu0 %v965
    %1207 = vmatpush.msra.mxu0 %v961
    %1208 = vmatpush.msra.mxu0 %v957
    %1209 = vmatpush.msra.mxu0 %v953
    %1210 = vmatpush.msra.mxu0 %v949
    %1211 = vmatpush.msra.mxu0 %v945
    %1212 = vmatpush.msra.mxu0 %v941
    %1213 = vmatpush.msra.mxu0 %v937
    %1214 = vmatpush.msra.mxu0 %v933
    %1215 = vmatpush.msra.mxu0 %v929
    %1216 = vmatpush.msra.mxu0 %v925
    %1217 = vmatmul.f32.gmra.mxu0 %v857
    %v1218 = vpop.f32.mrf.mxu0
    %v1219 = vadd.f32 %v1199, %v1218
    %1220 = vdwg.mxu0
    %1221 = vmatpush.msra.mxu0 %v1049
    %1222 = vmatpush.msra.mxu0 %v1045
    %1223 = vmatpush.msra.mxu0 %v1041
    %1224 = vmatpush.msra.mxu0 %v1037
    %1225 = vmatpush.msra.mxu0 %v1033
    %1226 = vmatpush.msra.mxu0 %v1029
    %1227 = vmatpush.msra.mxu0 %v1025
    %1228 = vmatpush.msra.mxu0 %v1021
    %1229 = vmatpush.msra.mxu0 %v1017
    %1230 = vmatpush.msra.mxu0 %v1013
    %1231 = vmatpush.msra.mxu0 %v1009
    %1232 = vmatpush.msra.mxu0 %v1005
    %1233 = vmatpush.msra.mxu0 %v1001
    %1234 = vmatpush.msra.mxu0 %v997
    %1235 = vmatpush.msra.mxu0 %v993
    %1236 = vmatpush.msra.mxu0 %v989
    %1237 = vmatmul.f32.gmra.mxu0 %v89
    %v1238 = vpop.f32.mrf.mxu0
    %v1239 = vadd.f32 %v1219, %v1238
    %1240 = vdwg.mxu0
    %1241 = vmatpush.msra.mxu0 %v922
    %1242 = vmatpush.msra.mxu0 %v918
    %1243 = vmatpush.msra.mxu0 %v914
    %1244 = vmatpush.msra.mxu0 %v910
    %1245 = vmatpush.msra.mxu0 %v906
    %1246 = vmatpush.msra.mxu0 %v902
    %1247 = vmatpush.msra.mxu0 %v898
    %1248 = vmatpush.msra.mxu0 %v894
    %1249 = vmatpush.msra.mxu0 %v890
    %1250 = vmatpush.msra.mxu0 %v886
    %1251 = vmatpush.msra.mxu0 %v882
    %1252 = vmatpush.msra.mxu0 %v878
    %1253 = vmatpush.msra.mxu0 %v874
    %1254 = vmatpush.msra.mxu0 %v870
    %1255 = vmatpush.msra.mxu0 %v866
    %1256 = vmatpush.msra.mxu0 %v862
    %1257 = vmatmul.f32.gmra.mxu0 %v107
    %v1258 = vpop.f32.mrf.mxu0
    %v1259 = vadd.f32 %v1056, %v1258
    %1260 = vdwg.mxu0
    %1261 = vmatpush.msra.mxu0 %v986
    %1262 = vmatpush.msra.mxu0 %v982
    %1263 = vmatpush.msra.mxu0 %v978
    %1264 = vmatpush.msra.mxu0 %v974
    %1265 = vmatpush.msra.mxu0 %v970
    %1266 = vmatpush.msra.mxu0 %v966
    %1267 = vmatpush.msra.mxu0 %v962
    %1268 = vmatpush.msra.mxu0 %v958
    %1269 = vmatpush.msra.mxu0 %v954
    %1270 = vmatpush.msra.mxu0 %v950
    %1271 = vmatpush.msra.mxu0 %v946
    %1272 = vmatpush.msra.mxu0 %v942
    %1273 = vmatpush.msra.mxu0 %v938
    %1274 = vmatpush.msra.mxu0 %v934
    %1275 = vmatpush.msra.mxu0 %v930
    %1276 = vmatpush.msra.mxu0 %v926
    %1277 = vmatmul.f32.gmra.mxu0 %v857
    %v1278 = vpop.f32.mrf.mxu0
    %v1279 = vadd.f32 %v1259, %v1278
    %1280 = vdwg.mxu0
    %1281 = vmatpush.msra.mxu0 %v1050
    %1282 = vmatpush.msra.mxu0 %v1046
    %1283 = vmatpush.msra.mxu0 %v1042
    %1284 = vmatpush.msra.mxu0 %v1038
    %1285 = vmatpush.msra.mxu0 %v1034
    %1286 = vmatpush.msra.mxu0 %v1030
    %1287 = vmatpush.msra.mxu0 %v1026
    %1288 = vmatpush.msra.mxu0 %v1022
    %1289 = vmatpush.msra.mxu0 %v1018
    %1290 = vmatpush.msra.mxu0 %v1014
    %1291 = vmatpush.msra.mxu0 %v1010
    %1292 = vmatpush.msra.mxu0 %v1006
    %1293 = vmatpush.msra.mxu0 %v1002
    %1294 = vmatpush.msra.mxu0 %v998
    %1295 = vmatpush.msra.mxu0 %v994
    %1296 = vmatpush.msra.mxu0 %v990
    %1297 = vmatmul.f32.gmra.mxu0 %v89
    %v1298 = vpop.f32.mrf.mxu0
    %v1299 = vadd.f32 %v1279, %v1298
    %1300 = vdwg.mxu0
    %v1301 = vxor.u32 %v1119, 2147483648
    %v1302 = vmul.f32 %v1301, 1.442695
    %v1303 = vpow.pop %v1302
    %v1304 = vadd.f32 %v1303, 1.0
    %v1305 = vrcp.pop %v1304
    %v1306 = vmul.f32 %v1304, %v1305
    %v1307 = vsub.f32 1.0, %v1306
    %v1308 = vmul.f32 %v1305, %v1307
    %v1309 = vadd.f32 %v1305, %v1308
    %vm1310 = vweird.f32 %v1304
    %vm1311 = vweird.f32 %v1305
    %vm1312 = vmor %vm1310, %vm1311
    %v1313 = vsel %vm1312, %v1305, %v1309
    %v1314 = vand.u32 2147483647, %v1304
    %vm1315 = vcmp.eq.f32.partialorder %v1314, 8.507059e+37
    %v1316 = vand.u32 %v1304, 2147483648
    %v1317 = vor.u32 1.1754944e-38, %v1316
    %v1318 = vsel %vm1315, %v1317, %v1313
    %v1319 = vmul.f32 1.0, %v1318
    %v1320 = vxor.u32 %v1179, 2147483648
    %v1321 = vmul.f32 %v1320, 1.442695
    %v1322 = vpow.pop %v1321
    %v1323 = vadd.f32 %v1322, 1.0
    %v1324 = vrcp.pop %v1323
    %v1325 = vmul.f32 %v1323, %v1324
    %v1326 = vsub.f32 1.0, %v1325
    %v1327 = vmul.f32 %v1324, %v1326
    %v1328 = vadd.f32 %v1324, %v1327
    %vm1329 = vweird.f32 %v1323
    %vm1330 = vweird.f32 %v1324
    %vm1331 = vmor %vm1329, %vm1330
    %v1332 = vsel %vm1331, %v1324, %v1328
    %v1333 = vand.u32 2147483647, %v1323
    %vm1334 = vcmp.eq.f32.partialorder %v1333, 8.507059e+37
    %v1335 = vand.u32 %v1323, 2147483648
    %v1336 = vor.u32 1.1754944e-38, %v1335
    %v1337 = vsel %vm1334, %v1336, %v1332
    %v1338 = vmul.f32 1.0, %v1337
    %v1339 = vtanh.pop %v1239
    %v1340 = vxor.u32 %v1299, 2147483648
    %v1341 = vmul.f32 %v1340, 1.442695
    %v1342 = vpow.pop %v1341
    %v1343 = vadd.f32 %v1342, 1.0
    %v1344 = vrcp.pop %v1343
    %v1345 = vmul.f32 %v1343, %v1344
    %v1346 = vsub.f32 1.0, %v1345
    %v1347 = vmul.f32 %v1344, %v1346
    %v1348 = vadd.f32 %v1344, %v1347
    %vm1349 = vweird.f32 %v1343
    %vm1350 = vweird.f32 %v1344
    %vm1351 = vmor %vm1349, %vm1350
    %v1352 = vsel %vm1351, %v1344, %v1348
    %v1353 = vand.u32 2147483647, %v1343
    %vm1354 = vcmp.eq.f32.partialorder %v1353, 8.507059e+37
    %v1355 = vand.u32 %v1343, 2147483648
    %v1356 = vor.u32 1.1754944e-38, %v1355
    %v1357 = vsel %vm1354, %v1356, %v1352
    %v1358 = vmul.f32 1.0, %v1357
    %v1359 = vmul.f32 %v1338, %v90
    %v1360 = vmul.f32 %v1319, %v1339
    %v1361 = vadd.f32 %v1359, %v1360
    %v1362 = vtanh.pop %v1361
    %v1363 = vmul.f32 %v1358, %v1362
    %1364 = vst [vmem:[#allocation10] sm:$0xff] %v1363
    %1365 = vst [vmem:[#allocation11] sm:$0xff] %v1361
    // Predicated region
    $region46: #{tpu_custom_call.1} parent=1 // pred_check
      _
    $region47: #{tpu_custom_call.1} parent=1 // pred_check_branch
      %1367 = sbr.rel (0) target = $region49
    $region48: #{tpu_custom_call.1} parent=1 // pred_region
      %1369 = vsyncadd [#allocation4], 0
      %s1371 = sshll.u32 [#allocation10], 4
      %s1372 = int_to_ptr.vmem [resolvable:$true] %s1371
      %s1373 = sshll.u32 %s7, 4
      %s1374 = int_to_ptr.hbm [resolvable:$true] %s1373
      %1376 = dma.vmem_to_hbm [thread:$0]  %s1372, 128, %s1374, [#allocation4]
    $region49: #{tpu_custom_call.1} parent=1 // pred_fallthru
      _
    // Predicated region
    $region50: #{tpu_custom_call.1} parent=1 // pred_check
      _
    $region51: #{tpu_custom_call.1} parent=1 // pred_check_branch
      %1378 = sbr.rel (0) target = $region53
    $region52: #{tpu_custom_call.1} parent=1 // pred_region
      %1380 = vsyncadd [#allocation12], 0
      %s1382 = sshll.u32 [#allocation11], 4
      %s1383 = int_to_ptr.vmem [resolvable:$true] %s1382
      %s1384 = sshll.u32 %s8, 4
      %s1385 = int_to_ptr.hbm [resolvable:$true] %s1384
      %1387 = dma.vmem_to_hbm [thread:$0]  %s1383, 128, %s1385, [#allocation12]
    $region53: #{tpu_custom_call.1} parent=1 // pred_fallthru
      _
    // Predicated region
    $region54: #{tpu_custom_call.1} parent=1 // pred_check
      _
    $region55: #{tpu_custom_call.1} parent=1 // pred_check_branch
      %1389 = sbr.rel (0) target = $region57
    $region56: #{tpu_custom_call.1} parent=1 // pred_region
      %1391 = dma.done [#allocation4], 128
    $region57: #{tpu_custom_call.1} parent=1 // pred_fallthru
      _
    // Predicated region
    $region58: #{tpu_custom_call.1} parent=1 // pred_check
      _
    $region59: #{tpu_custom_call.1} parent=1 // pred_check_branch
      %1393 = sbr.rel (0) target = $region61
    $region60: #{tpu_custom_call.1} parent=1 // pred_region
      %1395 = dma.done [#allocation12], 128
    $region61: #{tpu_custom_call.1} parent=1 // pred_fallthru
      _
    %1396 = vsyncpa [#allocation3], 1
    %1397 = vsyncpa [#allocation6], 1
    %1398 = vsyncpa [#allocation9], 1
    %1399 = vsyncpa [#allocation4], 1
    %1400 = vsyncpa [#allocation12], 1

</llo_original>
